<compile_context>
chip_gen: v7x
topology: tpu7x:2x2x1
jax: 0.10.0
libtpu: 0.0.40
codegen_flags: <defaults>
</compile_context>

<pallas_src>
import jax
import jax.numpy as jnp
import numpy as np
from jax.experimental import pallas as pl
from jax.experimental.pallas import tpu as pltpu


def funnel_kernel(x_ref, w_ref, b_ref, o_ref, xpad_ref):
    # x_ref:    (1, D, H8, CK)   one unpadded image, channels-last, (ci, kw) folded
    # w_ref:    (K, Cout)        K = k*k*CK, all taps folded into the contraction dim
    # b_ref:    (1, Cout)        bias
    # o_ref:    (1, Cout, M)     M = D*H8, lane-dense output block
    # xpad_ref: (Dp, Hp, CK)     VMEM scratch holding the zero-padded image
    _, D, H8, CK = x_ref.shape
    Dp, Hp, _ = xpad_ref.shape
    k = Dp - D + 1
    lpad, rpad = (k - 1) // 2, k // 2
    M = D * H8

    # In-kernel zero padding of D and H (W/kw is already folded into lanes).
    # Only the borders need zeroing; the interior is overwritten every grid step,
    # so this stays correct when megacore splits the batch grid across cores.
    if lpad > 0:
        xpad_ref[0:lpad, :, :] = jnp.zeros((lpad, Hp, CK), jnp.float32)
        xpad_ref[:, 0:lpad, :] = jnp.zeros((Dp, lpad, CK), jnp.float32)
    if rpad > 0:
        xpad_ref[Dp - rpad:Dp, :, :] = jnp.zeros((rpad, Hp, CK), jnp.float32)
        xpad_ref[:, Hp - rpad:Hp, :] = jnp.zeros((Dp, rpad, CK), jnp.float32)
    xpad_ref[lpad:lpad + D, lpad:lpad + H8, :] = x_ref[0]

    # In-VMEM im2col: fold the k*k (kd, kh) taps into the lane/contraction dim.
    slabs = [xpad_ref[kd:kd + D, kh:kh + H8, :]            # (D, H8, CK) each
             for kd in range(k) for kh in range(k)]
    patch = jnp.concatenate(slabs, axis=-1).reshape(M, k * k * CK)   # (M, K)

    # Single MXU pass per image; bias add is one (M, Cout) sweep (no acc loop).
    y = jnp.dot(patch, w_ref[...], preferred_element_type=jnp.float32) + b_ref[...]

    # Fused epilogue: (M, Cout) -> (Cout, M); the wrapper's reshape to
    # (N, Cout, D, H8) is then a free metadata-only reshape in XLA.
    o_ref[...] = y.T[None, :, :].astype(o_ref.dtype)


@jax.jit
def funnel_forward(x, weight, bias):
    """x: (N, Cin, D, H, W) NCDHW; weight: (Cout, Cin, k, k, k); bias: (Cout,).
    Returns (N, Cout, D, H) == Conv3d(ConstantPad3d(...)(x)).squeeze(-1) for W == k."""
    N, Cin, D, H, W = x.shape
    Cout, _, k, _, _ = weight.shape
    # TODO(synk): only the intended funnel case W == kernel_size (trailing W axis
    # collapses to 1 and is removed by squeeze(-1)) is implemented.
    if W != k:
        raise ValueError(f"Funnel kernel assumes W == kernel_size, got W={W}, k={k}")

    lpad, rpad = (k - 1) // 2, k // 2
    CK = Cin * k                          # (ci, kw) folded channel dim
    K = CK * k * k                        # folded contraction dim: (kd, kh, ci, kw)
    H8 = ((H + 7) // 8) * 8               # sublane-align H so in-kernel reshapes are free
    Dp, Hp = D + k - 1, H8 + k - 1
    M = D * H8

    # NCDHW -> channels-last (N, D, H8, Cin*W).  Conv zero-padding of D/H happens
    # inside the kernel, so the padded input is never written to HBM.
    # TODO(synk): the transpose still materializes xf in HBM; CompilerParams(
    # allow_input_fusion=...) could let XLA fuse it into the pallas_call operand.
    xf = jnp.transpose(x, (0, 2, 3, 1, 4)).reshape(N, D, H, CK).astype(jnp.float32)
    if H8 != H:
        xf = jnp.pad(xf, ((0, 0), (0, 0), (0, H8 - H), (0, 0)))

    # weight (Cout, Cin, kd, kh, kw) -> [(kd*k + kh)*CK + ci*k + kw, co]
    wf = jnp.transpose(weight, (2, 3, 1, 4, 0)).reshape(K, Cout).astype(jnp.float32)
    bf = bias.astype(jnp.float32).reshape(1, Cout)

    # TODO(synk): for large Cin*D*H a second grid axis tiling D (with a k-1 row
    # halo) is needed so blocks fit v7x's 64 MiB VMEM and both of its
    # TensorCores stay busy when N is small or odd.
    out = pl.pallas_call(
        funnel_kernel,
        out_shape=jax.ShapeDtypeStruct((N, Cout, M), jnp.float32),
        grid=(N,),
        in_specs=[
            pl.BlockSpec((1, D, H8, CK), lambda n: (n, 0, 0, 0)),
            pl.BlockSpec((K, Cout), lambda n: (0, 0)),
            pl.BlockSpec((1, Cout), lambda n: (0, 0)),
        ],
        out_specs=pl.BlockSpec((1, Cout, M), lambda n: (n, 0, 0)),
        scratch_shapes=[pltpu.VMEM((Dp, Hp, CK), jnp.float32)],
        compiler_params=pltpu.CompilerParams(
            dimension_semantics=("parallel",),
            vmem_limit_bytes=32 * 1024 * 1024,
        ),
    )(xf, wf, bf)

    # Metadata-only reshape; slice only if H had to be sublane-padded.
    out = out.reshape(N, Cout, D, H8)
    return out[..., :H] if H8 != H else out


def funnel_ref(x, weight, bias):
    """Plain-JAX reference (pad + 3-D conv + squeeze), used only for validation."""
    k = weight.shape[2]
    lpad, rpad = (k - 1) // 2, k // 2
    xp = jnp.pad(x, ((0, 0), (0, 0), (lpad, rpad), (lpad, rpad), (0, 0)))
    y = jax.lax.conv_general_dilated(
        xp, weight, window_strides=(1, 1, 1), padding="VALID",
        dimension_numbers=("NCDHW", "OIDHW", "NCDHW"))
    y = y + bias[None, :, None, None, None]
    return jnp.squeeze(y, axis=-1)


if __name__ == "__main__":
    N, Cin, Cout, D, H, k = 2, 4, 8, 16, 16, 3
    key = jax.random.PRNGKey(0)
    kx, kw_, kb_ = jax.random.split(key, 3)

    x = jax.random.normal(kx, (N, Cin, D, H, k), jnp.float32)
    weight = jax.random.normal(kw_, (Cout, Cin, k, k, k), jnp.float32) * 0.1
    bias = jax.random.normal(kb_, (Cout,), jnp.float32) * 0.1

    out = jax.block_until_ready(funnel_forward(x, weight, bias))
    ref = jax.block_until_ready(funnel_ref(x, weight, bias))
    np.testing.assert_allclose(np.asarray(out), np.asarray(ref), rtol=1e-3, atol=1e-3)
    print("KERNEL_OK")
</pallas_src>

<mosaic_0001>
module attributes {stable_mosaic.version = 11 : i64} {
  func.func @funnel_kernel(%arg0: i32, %arg1: memref<1x16x16x12xf32, #tpu.memory_space<vmem>>, %arg2: memref<108x8xf32, #tpu.memory_space<vmem>>, %arg3: memref<1x8xf32, #tpu.memory_space<vmem>>, %arg4: memref<1x8x256xf32, #tpu.memory_space<vmem>>, %arg5: memref<18x18x12xf32, #tpu.memory_space<vmem>>) attributes {dimension_semantics = [#tpu.dimension_semantics<parallel>], iteration_bounds = array<i64: 2>, scalar_prefetch = 0 : i64, scratch_operands = 1 : i64, tpu.core_type = #tpu.core_type<tc>, window_params = [{transform_indices = @transform_0, window_bounds = array<i64: 1, 16, 16, 12>}, {pipeline_mode = #tpu.pipeline_mode<synchronous>, transform_indices = @transform_1, window_bounds = array<i64: 108, 8>}, {pipeline_mode = #tpu.pipeline_mode<synchronous>, transform_indices = @transform_2, window_bounds = array<i64: 1, 8>}, {transform_indices = @transform_3, window_bounds = array<i64: 1, 8, 256>}]} {
    %cst = arith.constant 0.000000e+00 : f32
    %0 = vector.broadcast %cst : f32 to vector<1x18x12xf32>
    %c0 = arith.constant 0 : index
    %c0_0 = arith.constant 0 : index
    %c0_1 = arith.constant 0 : index
    %1 = vector.load %arg5[%c0, %c0_0, %c0_1] : memref<18x18x12xf32, #tpu.memory_space<vmem>>, vector<1x18x12xf32>
    tpu.vector_store %arg5[%c0, %c0_0, %c0_1], %0 {strides = array<i32>} : memref<18x18x12xf32, #tpu.memory_space<vmem>>, vector<1x18x12xf32>,
    %cst_2 = arith.constant 0.000000e+00 : f32
    %2 = vector.broadcast %cst_2 : f32 to vector<18x1x12xf32>
    %c0_3 = arith.constant 0 : index
    %c0_4 = arith.constant 0 : index
    %c0_5 = arith.constant 0 : index
    %3 = vector.load %arg5[%c0_3, %c0_4, %c0_5] : memref<18x18x12xf32, #tpu.memory_space<vmem>>, vector<18x1x12xf32>
    tpu.vector_store %arg5[%c0_3, %c0_4, %c0_5], %2 {strides = array<i32>} : memref<18x18x12xf32, #tpu.memory_space<vmem>>, vector<18x1x12xf32>,
    %cst_6 = arith.constant 0.000000e+00 : f32
    %4 = vector.broadcast %cst_6 : f32 to vector<1x18x12xf32>
    %c17 = arith.constant 17 : index
    %c0_7 = arith.constant 0 : index
    %c0_8 = arith.constant 0 : index
    %5 = vector.load %arg5[%c17, %c0_7, %c0_8] : memref<18x18x12xf32, #tpu.memory_space<vmem>>, vector<1x18x12xf32>
    tpu.vector_store %arg5[%c17, %c0_7, %c0_8], %4 {strides = array<i32>} : memref<18x18x12xf32, #tpu.memory_space<vmem>>, vector<1x18x12xf32>,
    %cst_9 = arith.constant 0.000000e+00 : f32
    %6 = vector.broadcast %cst_9 : f32 to vector<18x1x12xf32>
    %c0_10 = arith.constant 0 : index
    %c17_11 = arith.constant 17 : index
    %c0_12 = arith.constant 0 : index
    %7 = vector.load %arg5[%c0_10, %c17_11, %c0_12] : memref<18x18x12xf32, #tpu.memory_space<vmem>>, vector<18x1x12xf32>
    tpu.vector_store %arg5[%c0_10, %c17_11, %c0_12], %6 {strides = array<i32>} : memref<18x18x12xf32, #tpu.memory_space<vmem>>, vector<18x1x12xf32>,
    %c0_13 = arith.constant 0 : index
    %c0_14 = arith.constant 0 : index
    %c0_15 = arith.constant 0 : index
    %c0_16 = arith.constant 0 : index
    %8 = vector.load %arg1[%c0_13, %c0_14, %c0_15, %c0_16] : memref<1x16x16x12xf32, #tpu.memory_space<vmem>>, vector<1x16x16x12xf32>
    %9 = vector.shape_cast %8 : vector<1x16x16x12xf32> to vector<16x16x12xf32>
    %c1 = arith.constant 1 : index
    %c1_17 = arith.constant 1 : index
    %c0_18 = arith.constant 0 : index
    %10 = vector.load %arg5[%c1, %c1_17, %c0_18] : memref<18x18x12xf32, #tpu.memory_space<vmem>>, vector<16x16x12xf32>
    tpu.vector_store %arg5[%c1, %c1_17, %c0_18], %9 {strides = array<i32>} : memref<18x18x12xf32, #tpu.memory_space<vmem>>, vector<16x16x12xf32>,
    %c0_19 = arith.constant 0 : index
    %c0_20 = arith.constant 0 : index
    %c0_21 = arith.constant 0 : index
    %11 = vector.load %arg5[%c0_19, %c0_20, %c0_21] : memref<18x18x12xf32, #tpu.memory_space<vmem>>, vector<16x16x12xf32>
    %c0_22 = arith.constant 0 : index
    %c1_23 = arith.constant 1 : index
    %c0_24 = arith.constant 0 : index
    %12 = vector.load %arg5[%c0_22, %c1_23, %c0_24] : memref<18x18x12xf32, #tpu.memory_space<vmem>>, vector<16x16x12xf32>
    %c0_25 = arith.constant 0 : index
    %c2 = arith.constant 2 : index
    %c0_26 = arith.constant 0 : index
    %13 = vector.load %arg5[%c0_25, %c2, %c0_26] : memref<18x18x12xf32, #tpu.memory_space<vmem>>, vector<16x16x12xf32>
    %c1_27 = arith.constant 1 : index
    %c0_28 = arith.constant 0 : index
    %c0_29 = arith.constant 0 : index
    %14 = vector.load %arg5[%c1_27, %c0_28, %c0_29] : memref<18x18x12xf32, #tpu.memory_space<vmem>>, vector<16x16x12xf32>
    %c1_30 = arith.constant 1 : index
    %c1_31 = arith.constant 1 : index
    %c0_32 = arith.constant 0 : index
    %15 = vector.load %arg5[%c1_30, %c1_31, %c0_32] : memref<18x18x12xf32, #tpu.memory_space<vmem>>, vector<16x16x12xf32>
    %c1_33 = arith.constant 1 : index
    %c2_34 = arith.constant 2 : index
    %c0_35 = arith.constant 0 : index
    %16 = vector.load %arg5[%c1_33, %c2_34, %c0_35] : memref<18x18x12xf32, #tpu.memory_space<vmem>>, vector<16x16x12xf32>
    %c2_36 = arith.constant 2 : index
    %c0_37 = arith.constant 0 : index
    %c0_38 = arith.constant 0 : index
    %17 = vector.load %arg5[%c2_36, %c0_37, %c0_38] : memref<18x18x12xf32, #tpu.memory_space<vmem>>, vector<16x16x12xf32>
    %c2_39 = arith.constant 2 : index
    %c1_40 = arith.constant 1 : index
    %c0_41 = arith.constant 0 : index
    %18 = vector.load %arg5[%c2_39, %c1_40, %c0_41] : memref<18x18x12xf32, #tpu.memory_space<vmem>>, vector<16x16x12xf32>
    %c2_42 = arith.constant 2 : index
    %c2_43 = arith.constant 2 : index
    %c0_44 = arith.constant 0 : index
    %19 = vector.load %arg5[%c2_42, %c2_43, %c0_44] : memref<18x18x12xf32, #tpu.memory_space<vmem>>, vector<16x16x12xf32>
    %20 = tpu.concatenate %11, %12, %13, %14, %15, %16, %17, %18, %19 in 2 : vector<16x16x12xf32>, vector<16x16x12xf32>, vector<16x16x12xf32>, vector<16x16x12xf32>, vector<16x16x12xf32>, vector<16x16x12xf32>, vector<16x16x12xf32>, vector<16x16x12xf32>, vector<16x16x12xf32> -> vector<16x16x108xf32>
    %21 = vector.shape_cast %20 : vector<16x16x108xf32> to vector<256x108xf32>
    %c0_45 = arith.constant 0 : index
    %c0_46 = arith.constant 0 : index
    %22 = vector.load %arg2[%c0_45, %c0_46] : memref<108x8xf32, #tpu.memory_space<vmem>>, vector<108x8xf32>
    %cst_47 = arith.constant dense<0.000000e+00> : vector<256x8xf32>
    %23 = tpu.matmul %21, %22, %cst_47 {dimension_numbers = #tpu.dot_dimension_numbers<[1], [0], [0], [1], [0, 0, 1, 1], [], []>} : vector<256x108xf32>, vector<108x8xf32>, vector<256x8xf32> -> vector<256x8xf32>
    %c0_48 = arith.constant 0 : index
    %c0_49 = arith.constant 0 : index
    %24 = vector.load %arg3[%c0_48, %c0_49] : memref<1x8xf32, #tpu.memory_space<vmem>>, vector<1x8xf32>
    %25 = vector.broadcast %24 : vector<1x8xf32> to vector<256x8xf32>
    %26 = arith.addf %23, %25 : vector<256x8xf32>
    %27 = tpu.transpose %26, [1, 0] : vector<256x8xf32> -> vector<8x256xf32>
    %28 = vector.shape_cast %27 : vector<8x256xf32> to vector<1x8x256xf32>
    %c0_50 = arith.constant 0 : index
    %c0_51 = arith.constant 0 : index
    %c0_52 = arith.constant 0 : index
    %29 = vector.load %arg4[%c0_50, %c0_51, %c0_52] : memref<1x8x256xf32, #tpu.memory_space<vmem>>, vector<1x8x256xf32>
    tpu.vector_store %arg4[%c0_50, %c0_51, %c0_52], %28 {strides = array<i32>} : memref<1x8x256xf32, #tpu.memory_space<vmem>>, vector<1x8x256xf32>,
    return
  }
  func.func @transform_0(%arg0: i32) -> (i32, i32, i32, i32) {
    %c0_i32 = arith.constant 0 : i32
    %c0_i32_0 = arith.constant 0 : i32
    %c0_i32_1 = arith.constant 0 : i32
    %c0_i32_2 = arith.constant 0 : i32
    return %arg0, %c0_i32, %c0_i32_0, %c0_i32_1 : i32, i32, i32, i32
  }
  func.func @transform_1(%arg0: i32) -> (i32, i32) {
    %c0_i32 = arith.constant 0 : i32
    %c0_i32_0 = arith.constant 0 : i32
    %c0_i32_1 = arith.constant 0 : i32
    return %c0_i32, %c0_i32_0 : i32, i32
  }
  func.func @transform_2(%arg0: i32) -> (i32, i32) {
    %c0_i32 = arith.constant 0 : i32
    %c0_i32_0 = arith.constant 0 : i32
    %c0_i32_1 = arith.constant 0 : i32
    return %c0_i32, %c0_i32_0 : i32, i32
  }
  func.func @transform_3(%arg0: i32) -> (i32, i32, i32) {
    %c0_i32 = arith.constant 0 : i32
    %c0_i32_0 = arith.constant 0 : i32
    %c0_i32_1 = arith.constant 0 : i32
    return %arg0, %c0_i32, %c0_i32_0 : i32, i32, i32
  }
}

</mosaic_0001>

<llo_original>
// kernel: funnel_forward.1
$region0: #{funnel_forward.1}
  #allocation0 [shape = 'u32[]', space=smem, size = 0x4, offset = 0x4, fixed_abs, tag = 'smem constant byte address 0x4 - core index']
  #allocation1 [shape = 'u32[144,128]{1,0:T(1,128)}', space=vmem, size = 0x12000, scoped, tag = 'internal scratch']
  #allocation2 [shape = 'f32[18,18,12]{2,1,0:T(8,128)}', space=vmem, size = 0x36000, scoped, tag = 'scratch operand']
  %s0 = inlined_call_operand.vmem [shape: f32[2,16,16,12], index: 0, kind: input, shape index: {}]
  %s1 = inlined_call_operand.vmem [shape: f32[108,8], index: 1, kind: input, shape index: {}]
  %s2 = inlined_call_operand.vmem [shape: f32[1,8], index: 2, kind: input, shape index: {}]
  %s3 = inlined_call_operand.vmem [shape: f32[2,8,256], index: 3, kind: output, shape index: {}]
  %s4 = sld [smem:[#allocation0]]
  $region45: #{funnel_forward.1} parent=0
    _
  %s6 = ssub.s32 1, %s4
  %s7 = scalar_select 0, %s6, %s4
  loop: start=0, step=1, limit=4
  $region2: #{funnel_forward.1} parent=0 // loop_pre_header
    _
  $region3: #{funnel_forward.1} parent=0 // loop_header
    %s9 = sphi 0, %s13
    %p10 = scmp.ge.s32.totalorder %s9, 4
    %s19 = sphi 0, %s21
    %s22 = sphi 0, %s19
    %s23 = sphi 0, %s22
    %s39 = sphi 0, %s23
    %s43 = sphi 0, %s43
    %s45 = sphi 0, %s43
    %s46 = sphi 0, %s45
    %s60 = sphi 0, %s46
    %s64 = sphi 0, %s64
    %s66 = sphi 0, %s64
    %s67 = sphi 0, %s66
    %s81 = sphi 0, %s67
    %s87 = sphi 0, %s89
    %s90 = sphi 0, %s87
    %s91 = sphi 0, %s90
    %s107 = sphi 0, %s91
  $region4: #{funnel_forward.1} parent=0 // loop_header_branch
    %12 = sbr.rel (%p10) target = $region8
  $region5: #{funnel_forward.1} parent=0 // loop_body
    %s14 = ssub.s32 %s9, 1
    %s15 = ssub.s32 %s9, 2
    %s16 = sadd.s32 %s9, 1
    %s17 = ssub.s32 %s9, %s16
    %p18 = scmp.eq.s32.totalorder %s17, 0
    %s20 = sadd.s32 %s19, 1
    %s21 = scalar_select %p18, %s19, %s20
    %p24 = pneg %p18
    %p25 = scmp.eq.s32.totalorder %s9, 1
    %p26 = por %p24, %p25
    %p27 = scmp.ne.s32.totalorder %s19, %s22
    %p28 = scmp.eq.s32.totalorder %s9, 0
    %p29 = por %p27, %p28
    %p30 = scmp.ne.s32.totalorder %s19, %s22
    %p31 = scmp.eq.s32.totalorder %s14, 1
    %p32 = por %p30, %p31
    %p33 = scmp.ne.s32.totalorder %s22, %s23
    %p34 = scmp.eq.s32.totalorder %s14, 0
    %p35 = por %p33, %p34
    %p36 = scmp.ne.s32.totalorder %s22, %s23
    %p37 = scmp.eq.s32.totalorder %s15, 1
    %p38 = por %p36, %p37
    %p40 = scmp.ne.s32.totalorder %s23, %s39
    %p41 = scmp.eq.s32.totalorder %s15, 0
    %p42 = por %p40, %p41
    %s44 = sadd.s32 %s43, 1
    %p47 = scmp.eq.s32.totalorder %s9, 1
    %p48 = scmp.ne.s32.totalorder %s43, %s45
    %p49 = scmp.eq.s32.totalorder %s9, 0
    %p50 = por %p48, %p49
    %p51 = scmp.ne.s32.totalorder %s43, %s45
    %p52 = scmp.eq.s32.totalorder %s14, 1
    %p53 = por %p51, %p52
    %p54 = scmp.ne.s32.totalorder %s45, %s46
    %p55 = scmp.eq.s32.totalorder %s14, 0
    %p56 = por %p54, %p55
    %p57 = scmp.ne.s32.totalorder %s45, %s46
    %p58 = scmp.eq.s32.totalorder %s15, 1
    %p59 = por %p57, %p58
    %p61 = scmp.ne.s32.totalorder %s46, %s60
    %p62 = scmp.eq.s32.totalorder %s15, 0
    %p63 = por %p61, %p62
    %s65 = sadd.s32 %s64, 1
    %p68 = scmp.eq.s32.totalorder %s9, 1
    %p69 = scmp.ne.s32.totalorder %s64, %s66
    %p70 = scmp.eq.s32.totalorder %s9, 0
    %p71 = por %p69, %p70
    %p72 = scmp.ne.s32.totalorder %s64, %s66
    %p73 = scmp.eq.s32.totalorder %s14, 1
    %p74 = por %p72, %p73
    %p75 = scmp.ne.s32.totalorder %s66, %s67
    %p76 = scmp.eq.s32.totalorder %s14, 0
    %p77 = por %p75, %p76
    %p78 = scmp.ne.s32.totalorder %s66, %s67
    %p79 = scmp.eq.s32.totalorder %s15, 1
    %p80 = por %p78, %p79
    %p82 = scmp.ne.s32.totalorder %s67, %s81
    %p83 = scmp.eq.s32.totalorder %s15, 0
    %p84 = por %p82, %p83
    %s85 = ssub.s32 %s9, %s16
    %p86 = scmp.eq.s32.totalorder %s85, 0
    %s88 = sadd.s32 %s87, 1
    %s89 = scalar_select %p86, %s87, %s88
    %p92 = pneg %p86
    %p93 = scmp.eq.s32.totalorder %s9, 1
    %p94 = por %p92, %p93
    %p95 = scmp.ne.s32.totalorder %s87, %s90
    %p96 = scmp.eq.s32.totalorder %s9, 0
    %p97 = por %p95, %p96
    %p98 = scmp.ne.s32.totalorder %s87, %s90
    %p99 = scmp.eq.s32.totalorder %s14, 1
    %p100 = por %p98, %p99
    %p101 = scmp.ne.s32.totalorder %s90, %s91
    %p102 = scmp.eq.s32.totalorder %s14, 0
    %p103 = por %p101, %p102
    %p104 = scmp.ne.s32.totalorder %s90, %s91
    %p105 = scmp.eq.s32.totalorder %s15, 1
    %p106 = por %p104, %p105
    %p108 = scmp.ne.s32.totalorder %s91, %s107
    %p109 = scmp.eq.s32.totalorder %s15, 0
    %p110 = por %p108, %p109
    %p111 = scmp.le.s32.totalorder 1, %s9
    %p112 = scmp.lt.s32.totalorder %s9, 3
    %p113 = pnand %p111, %p112
    %p114 = pneg %p113
    // Predicated region
    $region9: #{funnel_forward.1} parent=5 // pred_check
      _
    $region10: #{funnel_forward.1} parent=5 // pred_check_branch
      %116 = sbr.rel (%p113) target = $region12
    $region11: #{funnel_forward.1} parent=5 // pred_region
      %s117 = ssub.s32 %s9, 1
      // Predicated region
      $region13: #{funnel_forward.1} parent=11 // pred_check
        %p118 = pneg %p56
      $region14: #{funnel_forward.1} parent=11 // pred_check_branch
        %120 = sbr.rel (%p118) target = $region16
      $region15: #{funnel_forward.1} parent=11 // pred_region
        _
      $region16: #{funnel_forward.1} parent=11 // pred_fallthru
        _
      // Predicated region
      $region17: #{funnel_forward.1} parent=11 // pred_check
        %p121 = pneg %p77
      $region18: #{funnel_forward.1} parent=11 // pred_check_branch
        %123 = sbr.rel (%p121) target = $region20
      $region19: #{funnel_forward.1} parent=11 // pred_region
        _
      $region20: #{funnel_forward.1} parent=11 // pred_fallthru
        _
    $region12: #{funnel_forward.1} parent=5 // pred_fallthru
      _
    %p124 = scmp.lt.s32.totalorder %s9, 2
    // Predicated region
    $region21: #{funnel_forward.1} parent=5 // pred_check
      %p125 = pneg %p124
    $region22: #{funnel_forward.1} parent=5 // pred_check_branch
      %127 = sbr.rel (%p125) target = $region24
    $region23: #{funnel_forward.1} parent=5 // pred_region
      // Predicated region
      $region25: #{funnel_forward.1} parent=23 // pred_check
        %p128 = pneg %p29
      $region26: #{funnel_forward.1} parent=23 // pred_check_branch
        %130 = sbr.rel (%p128) target = $region28
      $region27: #{funnel_forward.1} parent=23 // pred_region
        %p131 = scmp.lt.s32.totalorder %s9, 1
        %s132 = scalar_select %p131, %s9, 1
        %s133 = smul.addr %s132, 32
        %s134 = smul.addr %s133, 8
        %s135 = scalar_lea.vmem %s0, %s134
      $region28: #{funnel_forward.1} parent=23 // pred_fallthru
        _
    $region24: #{funnel_forward.1} parent=5 // pred_fallthru
      _
    %p136 = scmp.le.s32.totalorder 1, %s9
    %p137 = scmp.lt.s32.totalorder %s9, 3
    %p138 = pnand %p136, %p137
    %p139 = pneg %p138
    // Predicated region
    $region29: #{funnel_forward.1} parent=5 // pred_check
      _
    $region30: #{funnel_forward.1} parent=5 // pred_check_branch
      %141 = sbr.rel (%p138) target = $region32
    $region31: #{funnel_forward.1} parent=5 // pred_region
      %s142 = ssub.s32 %s9, 1
      %p143 = scmp.lt.s32.totalorder %s14, 1
      %s144 = scalar_select %p143, %s14, 1
      %s145 = smul.addr %s144, 32
      %s146 = smul.addr %s145, 8
      %s147 = scalar_lea.vmem %s0, %s146
      %p148 = pneg %p35
      %p149 = pneg %p32
      %p150 = pneg %p56
      %p151 = pneg %p53
      %p152 = pneg %p77
      %p153 = pneg %p74
      %p154 = pneg %p103
      %p155 = pneg %p100
      %p156 = scmp.lt.s32.totalorder %s14, 1
      %s157 = scalar_select %p156, %s14, 1
      %s158 = smul.addr %s157, 2
      %s159 = smul.addr %s158, 8
      %s160 = scalar_lea.vmem %s3, %s159
      %p161 = scmp.lt.s32.totalorder %s14, 1
      %s162 = scalar_select %p161, %s14, 1
      %s163 = smul.addr %s162, 32
      %s164 = smul.addr %s163, 8
      %s165 = scalar_lea.vmem %s0, %s164
      %p166 = scmp.lt.s32.totalorder %s14, 1
      %s167 = scalar_select %p166, %s14, 1
      %s168 = smul.addr %s167, 2
      %s169 = smul.addr %s168, 8
      %s170 = scalar_lea.vmem %s3, %s169
      %vm171 = vcmask 97280
      %172 = vst.msk [vmem:[#allocation2] sm:$0xff] %vm171, 0.0
      %173 = vst.msk [vmem:[#allocation2 + $0x8] sm:$0xff] %vm171, 0.0
      %vm174 = vcmask 91136
      %175 = vst.msk [vmem:[#allocation2 + $0x10] sm:$0x3] %vm174, 0.0
      %vm176 = vcmask 90112
      %177 = vst.msk [vmem:[#allocation2] sm:$0x1] %vm176, 0.0
      %178 = vst.msk [vmem:[#allocation2 + $0x18] sm:$0x1] %vm176, 0.0
      %179 = vst.msk [vmem:[#allocation2 + $0x30] sm:$0x1] %vm176, 0.0
      %180 = vst.msk [vmem:[#allocation2 + $0x48] sm:$0x1] %vm176, 0.0
      %181 = vst.msk [vmem:[#allocation2 + $0x60] sm:$0x1] %vm176, 0.0
      %182 = vst.msk [vmem:[#allocation2 + $0x78] sm:$0x1] %vm176, 0.0
      %183 = vst.msk [vmem:[#allocation2 + $0x90] sm:$0x1] %vm176, 0.0
      %184 = vst.msk [vmem:[#allocation2 + $0xa8] sm:$0x1] %vm176, 0.0
      %185 = vst.msk [vmem:[#allocation2 + $0xc0] sm:$0x1] %vm176, 0.0
      %186 = vst.msk [vmem:[#allocation2 + $0xd8] sm:$0x1] %vm176, 0.0
      %187 = vst.msk [vmem:[#allocation2 + $0xf0] sm:$0x1] %vm176, 0.0
      %188 = vst.msk [vmem:[#allocation2 + $0x108] sm:$0x1] %vm176, 0.0
      %189 = vst.msk [vmem:[#allocation2 + $0x120] sm:$0x1] %vm176, 0.0
      %190 = vst.msk [vmem:[#allocation2 + $0x138] sm:$0x1] %vm176, 0.0
      %191 = vst.msk [vmem:[#allocation2 + $0x150] sm:$0x1] %vm176, 0.0
      %192 = vst.msk [vmem:[#allocation2 + $0x168] sm:$0x1] %vm176, 0.0
      %193 = vst.msk [vmem:[#allocation2 + $0x180] sm:$0x1] %vm176, 0.0
      %194 = vst.msk [vmem:[#allocation2 + $0x198] sm:$0x1] %vm176, 0.0
      %s195 = scalar_lea.vmem [#allocation2], 408
      %196 = vst.msk [vmem:[%s195] sm:$0xff] %vm171, 0.0
      %197 = vst.msk [vmem:[%s195 + $0x8] sm:$0xff] %vm171, 0.0
      %198 = vst.msk [vmem:[%s195 + $0x10] sm:$0x3] %vm174, 0.0
      %199 = vst.msk [vmem:[#allocation2 + $0x11] sm:$0x1] %vm176, 0.0
      %200 = vst.msk [vmem:[#allocation2 + $0x29] sm:$0x1] %vm176, 0.0
      %201 = vst.msk [vmem:[#allocation2 + $0x41] sm:$0x1] %vm176, 0.0
      %202 = vst.msk [vmem:[#allocation2 + $0x59] sm:$0x1] %vm176, 0.0
      %203 = vst.msk [vmem:[#allocation2 + $0x71] sm:$0x1] %vm176, 0.0
      %204 = vst.msk [vmem:[#allocation2 + $0x89] sm:$0x1] %vm176, 0.0
      %205 = vst.msk [vmem:[#allocation2 + $0xa1] sm:$0x1] %vm176, 0.0
      %206 = vst.msk [vmem:[#allocation2 + $0xb9] sm:$0x1] %vm176, 0.0
      %207 = vst.msk [vmem:[#allocation2 + $0xd1] sm:$0x1] %vm176, 0.0
      %208 = vst.msk [vmem:[#allocation2 + $0xe9] sm:$0x1] %vm176, 0.0
      %209 = vst.msk [vmem:[#allocation2 + $0x101] sm:$0x1] %vm176, 0.0
      %210 = vst.msk [vmem:[#allocation2 + $0x119] sm:$0x1] %vm176, 0.0
      %211 = vst.msk [vmem:[#allocation2 + $0x131] sm:$0x1] %vm176, 0.0
      %212 = vst.msk [vmem:[#allocation2 + $0x149] sm:$0x1] %vm176, 0.0
      %213 = vst.msk [vmem:[#allocation2 + $0x161] sm:$0x1] %vm176, 0.0
      %214 = vst.msk [vmem:[#allocation2 + $0x179] sm:$0x1] %vm176, 0.0
      %215 = vst.msk [vmem:[#allocation2 + $0x191] sm:$0x1] %vm176, 0.0
      %216 = vst.msk [vmem:[#allocation2 + $0x1a9] sm:$0x1] %vm176, 0.0
      %v217 = vld [vmem:[%s165] sm:$0xff]
      %v218 = vld [vmem:[%s165 + $0x8] sm:$0xff]
      %v219 = vld [vmem:[%s165 + $0x10] sm:$0xff]
      %v220 = vld [vmem:[%s165 + $0x18] sm:$0xff]
      %v221 = vld [vmem:[%s165 + $0x20] sm:$0xff]
      %v222 = vld [vmem:[%s165 + $0x28] sm:$0xff]
      %v223 = vld [vmem:[%s165 + $0x30] sm:$0xff]
      %v224 = vld [vmem:[%s165 + $0x38] sm:$0xff]
      %v225 = vld [vmem:[%s165 + $0x40] sm:$0xff]
      %v226 = vld [vmem:[%s165 + $0x48] sm:$0xff]
      %v227 = vld [vmem:[%s165 + $0x50] sm:$0xff]
      %v228 = vld [vmem:[%s165 + $0x58] sm:$0xff]
      %v229 = vld [vmem:[%s165 + $0x60] sm:$0xff]
      %v230 = vld [vmem:[%s165 + $0x68] sm:$0xff]
      %v231 = vld [vmem:[%s165 + $0x70] sm:$0xff]
      %v232 = vld [vmem:[%s165 + $0x78] sm:$0xff]
      %v233 = vld [vmem:[%s165 + $0x80] sm:$0xff]
      %v234 = vld [vmem:[%s165 + $0x88] sm:$0xff]
      %v235 = vld [vmem:[%s165 + $0x90] sm:$0xff]
      %v236 = vld [vmem:[%s165 + $0x98] sm:$0xff]
      %v237 = vld [vmem:[%s165 + $0xa0] sm:$0xff]
      %v238 = vld [vmem:[%s165 + $0xa8] sm:$0xff]
      %v239 = vld [vmem:[%s165 + $0xb0] sm:$0xff]
      %v240 = vld [vmem:[%s165 + $0xb8] sm:$0xff]
      %v241 = vld [vmem:[%s165 + $0xc0] sm:$0xff]
      %v242 = vld [vmem:[%s165 + $0xc8] sm:$0xff]
      %v243 = vld [vmem:[%s165 + $0xd0] sm:$0xff]
      %v244 = vld [vmem:[%s165 + $0xd8] sm:$0xff]
      %v245 = vld [vmem:[%s165 + $0xe0] sm:$0xff]
      %v246 = vld [vmem:[%s165 + $0xe8] sm:$0xff]
      %v247 = vld [vmem:[%s165 + $0xf0] sm:$0xff]
      %v248 = vld [vmem:[%s165 + $0xf8] sm:$0xff]
      %s249 = scalar_lea.vmem [#allocation2], 24
      %250 = vst.msk [vmem:[%s249 + $0x1] sm:$0xff] %vm171, %v217
      %251 = vst.msk [vmem:[%s249 + $0x9] sm:$0xff] %vm171, %v218
      %252 = vst.msk [vmem:[%s249 + $0x19] sm:$0xff] %vm171, %v219
      %253 = vst.msk [vmem:[%s249 + $0x21] sm:$0xff] %vm171, %v220
      %254 = vst.msk [vmem:[%s249 + $0x31] sm:$0xff] %vm171, %v221
      %255 = vst.msk [vmem:[%s249 + $0x39] sm:$0xff] %vm171, %v222
      %256 = vst.msk [vmem:[%s249 + $0x49] sm:$0xff] %vm171, %v223
      %257 = vst.msk [vmem:[%s249 + $0x51] sm:$0xff] %vm171, %v224
      %258 = vst.msk [vmem:[%s249 + $0x61] sm:$0xff] %vm171, %v225
      %259 = vst.msk [vmem:[%s249 + $0x69] sm:$0xff] %vm171, %v226
      %260 = vst.msk [vmem:[%s249 + $0x79] sm:$0xff] %vm171, %v227
      %261 = vst.msk [vmem:[%s249 + $0x81] sm:$0xff] %vm171, %v228
      %262 = vst.msk [vmem:[%s249 + $0x91] sm:$0xff] %vm171, %v229
      %263 = vst.msk [vmem:[%s249 + $0x99] sm:$0xff] %vm171, %v230
      %264 = vst.msk [vmem:[%s249 + $0xa9] sm:$0xff] %vm171, %v231
      %265 = vst.msk [vmem:[%s249 + $0xb1] sm:$0xff] %vm171, %v232
      %266 = vst.msk [vmem:[%s249 + $0xc1] sm:$0xff] %vm171, %v233
      %267 = vst.msk [vmem:[%s249 + $0xc9] sm:$0xff] %vm171, %v234
      %268 = vst.msk [vmem:[%s249 + $0xd9] sm:$0xff] %vm171, %v235
      %269 = vst.msk [vmem:[%s249 + $0xe1] sm:$0xff] %vm171, %v236
      %270 = vst.msk [vmem:[%s249 + $0xf1] sm:$0xff] %vm171, %v237
      %271 = vst.msk [vmem:[%s249 + $0xf9] sm:$0xff] %vm171, %v238
      %272 = vst.msk [vmem:[%s249 + $0x109] sm:$0xff] %vm171, %v239
      %273 = vst.msk [vmem:[%s249 + $0x111] sm:$0xff] %vm171, %v240
      %274 = vst.msk [vmem:[%s249 + $0x121] sm:$0xff] %vm171, %v241
      %275 = vst.msk [vmem:[%s249 + $0x129] sm:$0xff] %vm171, %v242
      %276 = vst.msk [vmem:[%s249 + $0x139] sm:$0xff] %vm171, %v243
      %277 = vst.msk [vmem:[%s249 + $0x141] sm:$0xff] %vm171, %v244
      %278 = vst.msk [vmem:[%s249 + $0x151] sm:$0xff] %vm171, %v245
      %279 = vst.msk [vmem:[%s249 + $0x159] sm:$0xff] %vm171, %v246
      %280 = vst.msk [vmem:[%s249 + $0x169] sm:$0xff] %vm171, %v247
      %281 = vst.msk [vmem:[%s249 + $0x171] sm:$0xff] %vm171, %v248
      %v282 = vld [vmem:[#allocation2] sm:$0xff]
      %v283 = vld [vmem:[#allocation2 + $0x8] sm:$0xff]
      %v284 = vld [vmem:[#allocation2 + $0x18] sm:$0xff]
      %v285 = vld [vmem:[#allocation2 + $0x20] sm:$0xff]
      %v286 = vld [vmem:[#allocation2 + $0x30] sm:$0xff]
      %v287 = vld [vmem:[#allocation2 + $0x38] sm:$0xff]
      %v288 = vld [vmem:[#allocation2 + $0x48] sm:$0xff]
      %v289 = vld [vmem:[#allocation2 + $0x50] sm:$0xff]
      %v290 = vld [vmem:[#allocation2 + $0x60] sm:$0xff]
      %v291 = vld [vmem:[#allocation2 + $0x68] sm:$0xff]
      %v292 = vld [vmem:[#allocation2 + $0x78] sm:$0xff]
      %v293 = vld [vmem:[#allocation2 + $0x80] sm:$0xff]
      %v294 = vld [vmem:[#allocation2 + $0x90] sm:$0xff]
      %v295 = vld [vmem:[#allocation2 + $0x98] sm:$0xff]
      %v296 = vld [vmem:[#allocation2 + $0xa8] sm:$0xff]
      %v297 = vld [vmem:[#allocation2 + $0xb0] sm:$0xff]
      %v298 = vld [vmem:[#allocation2 + $0xc0] sm:$0xff]
      %v299 = vld [vmem:[#allocation2 + $0xc8] sm:$0xff]
      %v300 = vld [vmem:[#allocation2 + $0xd8] sm:$0xff]
      %v301 = vld [vmem:[#allocation2 + $0xe0] sm:$0xff]
      %v302 = vld [vmem:[#allocation2 + $0xf0] sm:$0xff]
      %v303 = vld [vmem:[#allocation2 + $0xf8] sm:$0xff]
      %v304 = vld [vmem:[#allocation2 + $0x108] sm:$0xff]
      %v305 = vld [vmem:[#allocation2 + $0x110] sm:$0xff]
      %v306 = vld [vmem:[#allocation2 + $0x120] sm:$0xff]
      %v307 = vld [vmem:[#allocation2 + $0x128] sm:$0xff]
      %v308 = vld [vmem:[#allocation2 + $0x138] sm:$0xff]
      %v309 = vld [vmem:[#allocation2 + $0x140] sm:$0xff]
      %v310 = vld [vmem:[#allocation2 + $0x150] sm:$0xff]
      %v311 = vld [vmem:[#allocation2 + $0x158] sm:$0xff]
      %v312 = vld [vmem:[#allocation2 + $0x168] sm:$0xff]
      %v313 = vld [vmem:[#allocation2 + $0x170] sm:$0xff]
      %v314 = vld [vmem:[#allocation2 + $0x1] sm:$0xff]
      %v315 = vld [vmem:[#allocation2 + $0x9] sm:$0xff]
      %v316 = vld [vmem:[#allocation2 + $0x19] sm:$0xff]
      %v317 = vld [vmem:[#allocation2 + $0x21] sm:$0xff]
      %v318 = vld [vmem:[#allocation2 + $0x31] sm:$0xff]
      %v319 = vld [vmem:[#allocation2 + $0x39] sm:$0xff]
      %v320 = vld [vmem:[#allocation2 + $0x49] sm:$0xff]
      %v321 = vld [vmem:[#allocation2 + $0x51] sm:$0xff]
      %v322 = vld [vmem:[#allocation2 + $0x61] sm:$0xff]
      %v323 = vld [vmem:[#allocation2 + $0x69] sm:$0xff]
      %v324 = vld [vmem:[#allocation2 + $0x79] sm:$0xff]
      %v325 = vld [vmem:[#allocation2 + $0x81] sm:$0xff]
      %v326 = vld [vmem:[#allocation2 + $0x91] sm:$0xff]
      %v327 = vld [vmem:[#allocation2 + $0x99] sm:$0xff]
      %v328 = vld [vmem:[#allocation2 + $0xa9] sm:$0xff]
      %v329 = vld [vmem:[#allocation2 + $0xb1] sm:$0xff]
      %v330 = vld [vmem:[#allocation2 + $0xc1] sm:$0xff]
      %v331 = vld [vmem:[#allocation2 + $0xc9] sm:$0xff]
      %v332 = vld [vmem:[#allocation2 + $0xd9] sm:$0xff]
      %v333 = vld [vmem:[#allocation2 + $0xe1] sm:$0xff]
      %v334 = vld [vmem:[#allocation2 + $0xf1] sm:$0xff]
      %v335 = vld [vmem:[#allocation2 + $0xf9] sm:$0xff]
      %v336 = vld [vmem:[#allocation2 + $0x109] sm:$0xff]
      %v337 = vld [vmem:[#allocation2 + $0x111] sm:$0xff]
      %v338 = vld [vmem:[#allocation2 + $0x121] sm:$0xff]
      %v339 = vld [vmem:[#allocation2 + $0x129] sm:$0xff]
      %v340 = vld [vmem:[#allocation2 + $0x139] sm:$0xff]
      %v341 = vld [vmem:[#allocation2 + $0x141] sm:$0xff]
      %v342 = vld [vmem:[#allocation2 + $0x151] sm:$0xff]
      %v343 = vld [vmem:[#allocation2 + $0x159] sm:$0xff]
      %v344 = vld [vmem:[#allocation2 + $0x169] sm:$0xff]
      %v345 = vld [vmem:[#allocation2 + $0x171] sm:$0xff]
      %v346 = vld [vmem:[#allocation2 + $0x2] sm:$0xff]
      %v347 = vld [vmem:[#allocation2 + $0xa] sm:$0xff]
      %v348 = vld [vmem:[#allocation2 + $0x1a] sm:$0xff]
      %v349 = vld [vmem:[#allocation2 + $0x22] sm:$0xff]
      %v350 = vld [vmem:[#allocation2 + $0x32] sm:$0xff]
      %v351 = vld [vmem:[#allocation2 + $0x3a] sm:$0xff]
      %v352 = vld [vmem:[#allocation2 + $0x4a] sm:$0xff]
      %v353 = vld [vmem:[#allocation2 + $0x52] sm:$0xff]
      %v354 = vld [vmem:[#allocation2 + $0x62] sm:$0xff]
      %v355 = vld [vmem:[#allocation2 + $0x6a] sm:$0xff]
      %v356 = vld [vmem:[#allocation2 + $0x7a] sm:$0xff]
      %v357 = vld [vmem:[#allocation2 + $0x82] sm:$0xff]
      %v358 = vld [vmem:[#allocation2 + $0x92] sm:$0xff]
      %v359 = vld [vmem:[#allocation2 + $0x9a] sm:$0xff]
      %v360 = vld [vmem:[#allocation2 + $0xaa] sm:$0xff]
      %v361 = vld [vmem:[#allocation2 + $0xb2] sm:$0xff]
      %v362 = vld [vmem:[#allocation2 + $0xc2] sm:$0xff]
      %v363 = vld [vmem:[#allocation2 + $0xca] sm:$0xff]
      %v364 = vld [vmem:[#allocation2 + $0xda] sm:$0xff]
      %v365 = vld [vmem:[#allocation2 + $0xe2] sm:$0xff]
      %v366 = vld [vmem:[#allocation2 + $0xf2] sm:$0xff]
      %v367 = vld [vmem:[#allocation2 + $0xfa] sm:$0xff]
      %v368 = vld [vmem:[#allocation2 + $0x10a] sm:$0xff]
      %v369 = vld [vmem:[#allocation2 + $0x112] sm:$0xff]
      %v370 = vld [vmem:[#allocation2 + $0x122] sm:$0xff]
      %v371 = vld [vmem:[#allocation2 + $0x12a] sm:$0xff]
      %v372 = vld [vmem:[#allocation2 + $0x13a] sm:$0xff]
      %v373 = vld [vmem:[#allocation2 + $0x142] sm:$0xff]
      %v374 = vld [vmem:[#allocation2 + $0x152] sm:$0xff]
      %v375 = vld [vmem:[#allocation2 + $0x15a] sm:$0xff]
      %v376 = vld [vmem:[#allocation2 + $0x16a] sm:$0xff]
      %v377 = vld [vmem:[#allocation2 + $0x172] sm:$0xff]
      %v378 = vld [vmem:[%s249] sm:$0xff]
      %v379 = vld [vmem:[%s249 + $0x8] sm:$0xff]
      %v380 = vld [vmem:[%s249 + $0x18] sm:$0xff]
      %v381 = vld [vmem:[%s249 + $0x20] sm:$0xff]
      %v382 = vld [vmem:[%s249 + $0x30] sm:$0xff]
      %v383 = vld [vmem:[%s249 + $0x38] sm:$0xff]
      %v384 = vld [vmem:[%s249 + $0x48] sm:$0xff]
      %v385 = vld [vmem:[%s249 + $0x50] sm:$0xff]
      %v386 = vld [vmem:[%s249 + $0x60] sm:$0xff]
      %v387 = vld [vmem:[%s249 + $0x68] sm:$0xff]
      %v388 = vld [vmem:[%s249 + $0x78] sm:$0xff]
      %v389 = vld [vmem:[%s249 + $0x80] sm:$0xff]
      %v390 = vld [vmem:[%s249 + $0x90] sm:$0xff]
      %v391 = vld [vmem:[%s249 + $0x98] sm:$0xff]
      %v392 = vld [vmem:[%s249 + $0xa8] sm:$0xff]
      %v393 = vld [vmem:[%s249 + $0xb0] sm:$0xff]
      %v394 = vld [vmem:[%s249 + $0xc0] sm:$0xff]
      %v395 = vld [vmem:[%s249 + $0xc8] sm:$0xff]
      %v396 = vld [vmem:[%s249 + $0xd8] sm:$0xff]
      %v397 = vld [vmem:[%s249 + $0xe0] sm:$0xff]
      %v398 = vld [vmem:[%s249 + $0xf0] sm:$0xff]
      %v399 = vld [vmem:[%s249 + $0xf8] sm:$0xff]
      %v400 = vld [vmem:[%s249 + $0x108] sm:$0xff]
      %v401 = vld [vmem:[%s249 + $0x110] sm:$0xff]
      %v402 = vld [vmem:[%s249 + $0x120] sm:$0xff]
      %v403 = vld [vmem:[%s249 + $0x128] sm:$0xff]
      %v404 = vld [vmem:[%s249 + $0x138] sm:$0xff]
      %v405 = vld [vmem:[%s249 + $0x140] sm:$0xff]
      %v406 = vld [vmem:[%s249 + $0x150] sm:$0xff]
      %v407 = vld [vmem:[%s249 + $0x158] sm:$0xff]
      %v408 = vld [vmem:[%s249 + $0x168] sm:$0xff]
      %v409 = vld [vmem:[%s249 + $0x170] sm:$0xff]
      %v410 = vld [vmem:[%s249 + $0x1] sm:$0xff]
      %v411 = vld [vmem:[%s249 + $0x9] sm:$0xff]
      %v412 = vld [vmem:[%s249 + $0x19] sm:$0xff]
      %v413 = vld [vmem:[%s249 + $0x21] sm:$0xff]
      %v414 = vld [vmem:[%s249 + $0x31] sm:$0xff]
      %v415 = vld [vmem:[%s249 + $0x39] sm:$0xff]
      %v416 = vld [vmem:[%s249 + $0x49] sm:$0xff]
      %v417 = vld [vmem:[%s249 + $0x51] sm:$0xff]
      %v418 = vld [vmem:[%s249 + $0x61] sm:$0xff]
      %v419 = vld [vmem:[%s249 + $0x69] sm:$0xff]
      %v420 = vld [vmem:[%s249 + $0x79] sm:$0xff]
      %v421 = vld [vmem:[%s249 + $0x81] sm:$0xff]
      %v422 = vld [vmem:[%s249 + $0x91] sm:$0xff]
      %v423 = vld [vmem:[%s249 + $0x99] sm:$0xff]
      %v424 = vld [vmem:[%s249 + $0xa9] sm:$0xff]
      %v425 = vld [vmem:[%s249 + $0xb1] sm:$0xff]
      %v426 = vld [vmem:[%s249 + $0xc1] sm:$0xff]
      %v427 = vld [vmem:[%s249 + $0xc9] sm:$0xff]
      %v428 = vld [vmem:[%s249 + $0xd9] sm:$0xff]
      %v429 = vld [vmem:[%s249 + $0xe1] sm:$0xff]
      %v430 = vld [vmem:[%s249 + $0xf1] sm:$0xff]
      %v431 = vld [vmem:[%s249 + $0xf9] sm:$0xff]
      %v432 = vld [vmem:[%s249 + $0x109] sm:$0xff]
      %v433 = vld [vmem:[%s249 + $0x111] sm:$0xff]
      %v434 = vld [vmem:[%s249 + $0x121] sm:$0xff]
      %v435 = vld [vmem:[%s249 + $0x129] sm:$0xff]
      %v436 = vld [vmem:[%s249 + $0x139] sm:$0xff]
      %v437 = vld [vmem:[%s249 + $0x141] sm:$0xff]
      %v438 = vld [vmem:[%s249 + $0x151] sm:$0xff]
      %v439 = vld [vmem:[%s249 + $0x159] sm:$0xff]
      %v440 = vld [vmem:[%s249 + $0x169] sm:$0xff]
      %v441 = vld [vmem:[%s249 + $0x171] sm:$0xff]
      %v442 = vld [vmem:[%s249 + $0x2] sm:$0xff]
      %v443 = vld [vmem:[%s249 + $0xa] sm:$0xff]
      %v444 = vld [vmem:[%s249 + $0x1a] sm:$0xff]
      %v445 = vld [vmem:[%s249 + $0x22] sm:$0xff]
      %v446 = vld [vmem:[%s249 + $0x32] sm:$0xff]
      %v447 = vld [vmem:[%s249 + $0x3a] sm:$0xff]
      %v448 = vld [vmem:[%s249 + $0x4a] sm:$0xff]
      %v449 = vld [vmem:[%s249 + $0x52] sm:$0xff]
      %v450 = vld [vmem:[%s249 + $0x62] sm:$0xff]
      %v451 = vld [vmem:[%s249 + $0x6a] sm:$0xff]
      %v452 = vld [vmem:[%s249 + $0x7a] sm:$0xff]
      %v453 = vld [vmem:[%s249 + $0x82] sm:$0xff]
      %v454 = vld [vmem:[%s249 + $0x92] sm:$0xff]
      %v455 = vld [vmem:[%s249 + $0x9a] sm:$0xff]
      %v456 = vld [vmem:[%s249 + $0xaa] sm:$0xff]
      %v457 = vld [vmem:[%s249 + $0xb2] sm:$0xff]
      %v458 = vld [vmem:[%s249 + $0xc2] sm:$0xff]
      %v459 = vld [vmem:[%s249 + $0xca] sm:$0xff]
      %v460 = vld [vmem:[%s249 + $0xda] sm:$0xff]
      %v461 = vld [vmem:[%s249 + $0xe2] sm:$0xff]
      %v462 = vld [vmem:[%s249 + $0xf2] sm:$0xff]
      %v463 = vld [vmem:[%s249 + $0xfa] sm:$0xff]
      %v464 = vld [vmem:[%s249 + $0x10a] sm:$0xff]
      %v465 = vld [vmem:[%s249 + $0x112] sm:$0xff]
      %v466 = vld [vmem:[%s249 + $0x122] sm:$0xff]
      %v467 = vld [vmem:[%s249 + $0x12a] sm:$0xff]
      %v468 = vld [vmem:[%s249 + $0x13a] sm:$0xff]
      %v469 = vld [vmem:[%s249 + $0x142] sm:$0xff]
      %v470 = vld [vmem:[%s249 + $0x152] sm:$0xff]
      %v471 = vld [vmem:[%s249 + $0x15a] sm:$0xff]
      %v472 = vld [vmem:[%s249 + $0x16a] sm:$0xff]
      %v473 = vld [vmem:[%s249 + $0x172] sm:$0xff]
      %s474 = scalar_lea.vmem [#allocation2], 48
      %v475 = vld [vmem:[%s474] sm:$0xff]
      %v476 = vld [vmem:[%s474 + $0x8] sm:$0xff]
      %v477 = vld [vmem:[%s474 + $0x18] sm:$0xff]
      %v478 = vld [vmem:[%s474 + $0x20] sm:$0xff]
      %v479 = vld [vmem:[%s474 + $0x30] sm:$0xff]
      %v480 = vld [vmem:[%s474 + $0x38] sm:$0xff]
      %v481 = vld [vmem:[%s474 + $0x48] sm:$0xff]
      %v482 = vld [vmem:[%s474 + $0x50] sm:$0xff]
      %v483 = vld [vmem:[%s474 + $0x60] sm:$0xff]
      %v484 = vld [vmem:[%s474 + $0x68] sm:$0xff]
      %v485 = vld [vmem:[%s474 + $0x78] sm:$0xff]
      %v486 = vld [vmem:[%s474 + $0x80] sm:$0xff]
      %v487 = vld [vmem:[%s474 + $0x90] sm:$0xff]
      %v488 = vld [vmem:[%s474 + $0x98] sm:$0xff]
      %v489 = vld [vmem:[%s474 + $0xa8] sm:$0xff]
      %v490 = vld [vmem:[%s474 + $0xb0] sm:$0xff]
      %v491 = vld [vmem:[%s474 + $0xc0] sm:$0xff]
      %v492 = vld [vmem:[%s474 + $0xc8] sm:$0xff]
      %v493 = vld [vmem:[%s474 + $0xd8] sm:$0xff]
      %v494 = vld [vmem:[%s474 + $0xe0] sm:$0xff]
      %v495 = vld [vmem:[%s474 + $0xf0] sm:$0xff]
      %v496 = vld [vmem:[%s474 + $0xf8] sm:$0xff]
      %v497 = vld [vmem:[%s474 + $0x108] sm:$0xff]
      %v498 = vld [vmem:[%s474 + $0x110] sm:$0xff]
      %v499 = vld [vmem:[%s474 + $0x120] sm:$0xff]
      %v500 = vld [vmem:[%s474 + $0x128] sm:$0xff]
      %v501 = vld [vmem:[%s474 + $0x138] sm:$0xff]
      %v502 = vld [vmem:[%s474 + $0x140] sm:$0xff]
      %v503 = vld [vmem:[%s474 + $0x150] sm:$0xff]
      %v504 = vld [vmem:[%s474 + $0x158] sm:$0xff]
      %v505 = vld [vmem:[%s474 + $0x168] sm:$0xff]
      %v506 = vld [vmem:[%s474 + $0x170] sm:$0xff]
      %v507 = vld [vmem:[%s474 + $0x1] sm:$0xff]
      %v508 = vld [vmem:[%s474 + $0x9] sm:$0xff]
      %v509 = vld [vmem:[%s474 + $0x19] sm:$0xff]
      %v510 = vld [vmem:[%s474 + $0x21] sm:$0xff]
      %v511 = vld [vmem:[%s474 + $0x31] sm:$0xff]
      %v512 = vld [vmem:[%s474 + $0x39] sm:$0xff]
      %v513 = vld [vmem:[%s474 + $0x49] sm:$0xff]
      %v514 = vld [vmem:[%s474 + $0x51] sm:$0xff]
      %v515 = vld [vmem:[%s474 + $0x61] sm:$0xff]
      %v516 = vld [vmem:[%s474 + $0x69] sm:$0xff]
      %v517 = vld [vmem:[%s474 + $0x79] sm:$0xff]
      %v518 = vld [vmem:[%s474 + $0x81] sm:$0xff]
      %v519 = vld [vmem:[%s474 + $0x91] sm:$0xff]
      %v520 = vld [vmem:[%s474 + $0x99] sm:$0xff]
      %v521 = vld [vmem:[%s474 + $0xa9] sm:$0xff]
      %v522 = vld [vmem:[%s474 + $0xb1] sm:$0xff]
      %v523 = vld [vmem:[%s474 + $0xc1] sm:$0xff]
      %v524 = vld [vmem:[%s474 + $0xc9] sm:$0xff]
      %v525 = vld [vmem:[%s474 + $0xd9] sm:$0xff]
      %v526 = vld [vmem:[%s474 + $0xe1] sm:$0xff]
      %v527 = vld [vmem:[%s474 + $0xf1] sm:$0xff]
      %v528 = vld [vmem:[%s474 + $0xf9] sm:$0xff]
      %v529 = vld [vmem:[%s474 + $0x109] sm:$0xff]
      %v530 = vld [vmem:[%s474 + $0x111] sm:$0xff]
      %v531 = vld [vmem:[%s474 + $0x121] sm:$0xff]
      %v532 = vld [vmem:[%s474 + $0x129] sm:$0xff]
      %v533 = vld [vmem:[%s474 + $0x139] sm:$0xff]
      %v534 = vld [vmem:[%s474 + $0x141] sm:$0xff]
      %v535 = vld [vmem:[%s474 + $0x151] sm:$0xff]
      %v536 = vld [vmem:[%s474 + $0x159] sm:$0xff]
      %v537 = vld [vmem:[%s474 + $0x169] sm:$0xff]
      %v538 = vld [vmem:[%s474 + $0x171] sm:$0xff]
      %v539 = vld [vmem:[%s474 + $0x2] sm:$0xff]
      %v540 = vld [vmem:[%s474 + $0xa] sm:$0xff]
      %v541 = vld [vmem:[%s474 + $0x1a] sm:$0xff]
      %v542 = vld [vmem:[%s474 + $0x22] sm:$0xff]
      %v543 = vld [vmem:[%s474 + $0x32] sm:$0xff]
      %v544 = vld [vmem:[%s474 + $0x3a] sm:$0xff]
      %v545 = vld [vmem:[%s474 + $0x4a] sm:$0xff]
      %v546 = vld [vmem:[%s474 + $0x52] sm:$0xff]
      %v547 = vld [vmem:[%s474 + $0x62] sm:$0xff]
      %v548 = vld [vmem:[%s474 + $0x6a] sm:$0xff]
      %v549 = vld [vmem:[%s474 + $0x7a] sm:$0xff]
      %v550 = vld [vmem:[%s474 + $0x82] sm:$0xff]
      %v551 = vld [vmem:[%s474 + $0x92] sm:$0xff]
      %v552 = vld [vmem:[%s474 + $0x9a] sm:$0xff]
      %v553 = vld [vmem:[%s474 + $0xaa] sm:$0xff]
      %v554 = vld [vmem:[%s474 + $0xb2] sm:$0xff]
      %v555 = vld [vmem:[%s474 + $0xc2] sm:$0xff]
      %v556 = vld [vmem:[%s474 + $0xca] sm:$0xff]
      %v557 = vld [vmem:[%s474 + $0xda] sm:$0xff]
      %v558 = vld [vmem:[%s474 + $0xe2] sm:$0xff]
      %v559 = vld [vmem:[%s474 + $0xf2] sm:$0xff]
      %v560 = vld [vmem:[%s474 + $0xfa] sm:$0xff]
      %v561 = vld [vmem:[%s474 + $0x10a] sm:$0xff]
      %v562 = vld [vmem:[%s474 + $0x112] sm:$0xff]
      %v563 = vld [vmem:[%s474 + $0x122] sm:$0xff]
      %v564 = vld [vmem:[%s474 + $0x12a] sm:$0xff]
      %v565 = vld [vmem:[%s474 + $0x13a] sm:$0xff]
      %v566 = vld [vmem:[%s474 + $0x142] sm:$0xff]
      %v567 = vld [vmem:[%s474 + $0x152] sm:$0xff]
      %v568 = vld [vmem:[%s474 + $0x15a] sm:$0xff]
      %v569 = vld [vmem:[%s474 + $0x16a] sm:$0xff]
      %v570 = vld [vmem:[%s474 + $0x172] sm:$0xff]
      %603 = vrot.lane.b32.xlu0 %v314, 12
      %v604 = vpop.permute.xlu0 %603
      %605 = vrot.lane.b32.xlu0 %v315, 12
      %v606 = vpop.permute.xlu0 %605
      %607 = vrot.lane.b32.xlu0 %v316, 12
      %v608 = vpop.permute.xlu0 %607
      %609 = vrot.lane.b32.xlu0 %v317, 12
      %v610 = vpop.permute.xlu0 %609
      %611 = vrot.lane.b32.xlu0 %v318, 12
      %v612 = vpop.permute.xlu0 %611
      %613 = vrot.lane.b32.xlu0 %v319, 12
      %v614 = vpop.permute.xlu0 %613
      %615 = vrot.lane.b32.xlu0 %v320, 12
      %v616 = vpop.permute.xlu0 %615
      %617 = vrot.lane.b32.xlu0 %v321, 12
      %v618 = vpop.permute.xlu0 %617
      %619 = vrot.lane.b32.xlu0 %v322, 12
      %v620 = vpop.permute.xlu0 %619
      %621 = vrot.lane.b32.xlu0 %v323, 12
      %v622 = vpop.permute.xlu0 %621
      %623 = vrot.lane.b32.xlu0 %v324, 12
      %v624 = vpop.permute.xlu0 %623
      %625 = vrot.lane.b32.xlu0 %v325, 12
      %v626 = vpop.permute.xlu0 %625
      %627 = vrot.lane.b32.xlu0 %v326, 12
      %v628 = vpop.permute.xlu0 %627
      %629 = vrot.lane.b32.xlu0 %v327, 12
      %v630 = vpop.permute.xlu0 %629
      %631 = vrot.lane.b32.xlu0 %v328, 12
      %v632 = vpop.permute.xlu0 %631
      %633 = vrot.lane.b32.xlu0 %v329, 12
      %v634 = vpop.permute.xlu0 %633
      %635 = vrot.lane.b32.xlu0 %v330, 12
      %v636 = vpop.permute.xlu0 %635
      %637 = vrot.lane.b32.xlu0 %v331, 12
      %v638 = vpop.permute.xlu0 %637
      %639 = vrot.lane.b32.xlu0 %v332, 12
      %v640 = vpop.permute.xlu0 %639
      %641 = vrot.lane.b32.xlu0 %v333, 12
      %v642 = vpop.permute.xlu0 %641
      %643 = vrot.lane.b32.xlu0 %v334, 12
      %v644 = vpop.permute.xlu0 %643
      %645 = vrot.lane.b32.xlu0 %v335, 12
      %v646 = vpop.permute.xlu0 %645
      %647 = vrot.lane.b32.xlu0 %v336, 12
      %v648 = vpop.permute.xlu0 %647
      %649 = vrot.lane.b32.xlu0 %v337, 12
      %v650 = vpop.permute.xlu0 %649
      %651 = vrot.lane.b32.xlu0 %v338, 12
      %v652 = vpop.permute.xlu0 %651
      %653 = vrot.lane.b32.xlu0 %v339, 12
      %v654 = vpop.permute.xlu0 %653
      %655 = vrot.lane.b32.xlu0 %v340, 12
      %v656 = vpop.permute.xlu0 %655
      %657 = vrot.lane.b32.xlu0 %v341, 12
      %v658 = vpop.permute.xlu0 %657
      %659 = vrot.lane.b32.xlu0 %v342, 12
      %v660 = vpop.permute.xlu0 %659
      %661 = vrot.lane.b32.xlu0 %v343, 12
      %v662 = vpop.permute.xlu0 %661
      %663 = vrot.lane.b32.xlu0 %v344, 12
      %v664 = vpop.permute.xlu0 %663
      %665 = vrot.lane.b32.xlu0 %v345, 12
      %v666 = vpop.permute.xlu0 %665
      %731 = vrot.lane.b32.xlu0 %v346, 24
      %v732 = vpop.permute.xlu0 %731
      %733 = vrot.lane.b32.xlu0 %v347, 24
      %v734 = vpop.permute.xlu0 %733
      %735 = vrot.lane.b32.xlu0 %v348, 24
      %v736 = vpop.permute.xlu0 %735
      %737 = vrot.lane.b32.xlu0 %v349, 24
      %v738 = vpop.permute.xlu0 %737
      %739 = vrot.lane.b32.xlu0 %v350, 24
      %v740 = vpop.permute.xlu0 %739
      %741 = vrot.lane.b32.xlu0 %v351, 24
      %v742 = vpop.permute.xlu0 %741
      %743 = vrot.lane.b32.xlu0 %v352, 24
      %v744 = vpop.permute.xlu0 %743
      %745 = vrot.lane.b32.xlu0 %v353, 24
      %v746 = vpop.permute.xlu0 %745
      %747 = vrot.lane.b32.xlu0 %v354, 24
      %v748 = vpop.permute.xlu0 %747
      %749 = vrot.lane.b32.xlu0 %v355, 24
      %v750 = vpop.permute.xlu0 %749
      %751 = vrot.lane.b32.xlu0 %v356, 24
      %v752 = vpop.permute.xlu0 %751
      %753 = vrot.lane.b32.xlu0 %v357, 24
      %v754 = vpop.permute.xlu0 %753
      %755 = vrot.lane.b32.xlu0 %v358, 24
      %v756 = vpop.permute.xlu0 %755
      %757 = vrot.lane.b32.xlu0 %v359, 24
      %v758 = vpop.permute.xlu0 %757
      %759 = vrot.lane.b32.xlu0 %v360, 24
      %v760 = vpop.permute.xlu0 %759
      %761 = vrot.lane.b32.xlu0 %v361, 24
      %v762 = vpop.permute.xlu0 %761
      %763 = vrot.lane.b32.xlu0 %v362, 24
      %v764 = vpop.permute.xlu0 %763
      %765 = vrot.lane.b32.xlu0 %v363, 24
      %v766 = vpop.permute.xlu0 %765
      %767 = vrot.lane.b32.xlu0 %v364, 24
      %v768 = vpop.permute.xlu0 %767
      %769 = vrot.lane.b32.xlu0 %v365, 24
      %v770 = vpop.permute.xlu0 %769
      %771 = vrot.lane.b32.xlu0 %v366, 24
      %v772 = vpop.permute.xlu0 %771
      %773 = vrot.lane.b32.xlu0 %v367, 24
      %v774 = vpop.permute.xlu0 %773
      %775 = vrot.lane.b32.xlu0 %v368, 24
      %v776 = vpop.permute.xlu0 %775
      %777 = vrot.lane.b32.xlu0 %v369, 24
      %v778 = vpop.permute.xlu0 %777
      %779 = vrot.lane.b32.xlu0 %v370, 24
      %v780 = vpop.permute.xlu0 %779
      %781 = vrot.lane.b32.xlu0 %v371, 24
      %v782 = vpop.permute.xlu0 %781
      %783 = vrot.lane.b32.xlu0 %v372, 24
      %v784 = vpop.permute.xlu0 %783
      %785 = vrot.lane.b32.xlu0 %v373, 24
      %v786 = vpop.permute.xlu0 %785
      %787 = vrot.lane.b32.xlu0 %v374, 24
      %v788 = vpop.permute.xlu0 %787
      %789 = vrot.lane.b32.xlu0 %v375, 24
      %v790 = vpop.permute.xlu0 %789
      %791 = vrot.lane.b32.xlu0 %v376, 24
      %v792 = vpop.permute.xlu0 %791
      %793 = vrot.lane.b32.xlu0 %v377, 24
      %v794 = vpop.permute.xlu0 %793
      %859 = vrot.lane.b32.xlu0 %v378, 36
      %v860 = vpop.permute.xlu0 %859
      %861 = vrot.lane.b32.xlu0 %v379, 36
      %v862 = vpop.permute.xlu0 %861
      %863 = vrot.lane.b32.xlu0 %v380, 36
      %v864 = vpop.permute.xlu0 %863
      %865 = vrot.lane.b32.xlu0 %v381, 36
      %v866 = vpop.permute.xlu0 %865
      %867 = vrot.lane.b32.xlu0 %v382, 36
      %v868 = vpop.permute.xlu0 %867
      %869 = vrot.lane.b32.xlu0 %v383, 36
      %v870 = vpop.permute.xlu0 %869
      %871 = vrot.lane.b32.xlu0 %v384, 36
      %v872 = vpop.permute.xlu0 %871
      %873 = vrot.lane.b32.xlu0 %v385, 36
      %v874 = vpop.permute.xlu0 %873
      %875 = vrot.lane.b32.xlu0 %v386, 36
      %v876 = vpop.permute.xlu0 %875
      %877 = vrot.lane.b32.xlu0 %v387, 36
      %v878 = vpop.permute.xlu0 %877
      %879 = vrot.lane.b32.xlu0 %v388, 36
      %v880 = vpop.permute.xlu0 %879
      %881 = vrot.lane.b32.xlu0 %v389, 36
      %v882 = vpop.permute.xlu0 %881
      %883 = vrot.lane.b32.xlu0 %v390, 36
      %v884 = vpop.permute.xlu0 %883
      %885 = vrot.lane.b32.xlu0 %v391, 36
      %v886 = vpop.permute.xlu0 %885
      %887 = vrot.lane.b32.xlu0 %v392, 36
      %v888 = vpop.permute.xlu0 %887
      %889 = vrot.lane.b32.xlu0 %v393, 36
      %v890 = vpop.permute.xlu0 %889
      %891 = vrot.lane.b32.xlu0 %v394, 36
      %v892 = vpop.permute.xlu0 %891
      %893 = vrot.lane.b32.xlu0 %v395, 36
      %v894 = vpop.permute.xlu0 %893
      %895 = vrot.lane.b32.xlu0 %v396, 36
      %v896 = vpop.permute.xlu0 %895
      %897 = vrot.lane.b32.xlu0 %v397, 36
      %v898 = vpop.permute.xlu0 %897
      %899 = vrot.lane.b32.xlu0 %v398, 36
      %v900 = vpop.permute.xlu0 %899
      %901 = vrot.lane.b32.xlu0 %v399, 36
      %v902 = vpop.permute.xlu0 %901
      %903 = vrot.lane.b32.xlu0 %v400, 36
      %v904 = vpop.permute.xlu0 %903
      %905 = vrot.lane.b32.xlu0 %v401, 36
      %v906 = vpop.permute.xlu0 %905
      %907 = vrot.lane.b32.xlu0 %v402, 36
      %v908 = vpop.permute.xlu0 %907
      %909 = vrot.lane.b32.xlu0 %v403, 36
      %v910 = vpop.permute.xlu0 %909
      %911 = vrot.lane.b32.xlu0 %v404, 36
      %v912 = vpop.permute.xlu0 %911
      %913 = vrot.lane.b32.xlu0 %v405, 36
      %v914 = vpop.permute.xlu0 %913
      %915 = vrot.lane.b32.xlu0 %v406, 36
      %v916 = vpop.permute.xlu0 %915
      %917 = vrot.lane.b32.xlu0 %v407, 36
      %v918 = vpop.permute.xlu0 %917
      %919 = vrot.lane.b32.xlu0 %v408, 36
      %v920 = vpop.permute.xlu0 %919
      %921 = vrot.lane.b32.xlu0 %v409, 36
      %v922 = vpop.permute.xlu0 %921
      %987 = vrot.lane.b32.xlu0 %v410, 48
      %v988 = vpop.permute.xlu0 %987
      %989 = vrot.lane.b32.xlu0 %v411, 48
      %v990 = vpop.permute.xlu0 %989
      %991 = vrot.lane.b32.xlu0 %v412, 48
      %v992 = vpop.permute.xlu0 %991
      %993 = vrot.lane.b32.xlu0 %v413, 48
      %v994 = vpop.permute.xlu0 %993
      %995 = vrot.lane.b32.xlu0 %v414, 48
      %v996 = vpop.permute.xlu0 %995
      %997 = vrot.lane.b32.xlu0 %v415, 48
      %v998 = vpop.permute.xlu0 %997
      %999 = vrot.lane.b32.xlu0 %v416, 48
      %v1000 = vpop.permute.xlu0 %999
      %1001 = vrot.lane.b32.xlu0 %v417, 48
      %v1002 = vpop.permute.xlu0 %1001
      %1003 = vrot.lane.b32.xlu0 %v418, 48
      %v1004 = vpop.permute.xlu0 %1003
      %1005 = vrot.lane.b32.xlu0 %v419, 48
      %v1006 = vpop.permute.xlu0 %1005
      %1007 = vrot.lane.b32.xlu0 %v420, 48
      %v1008 = vpop.permute.xlu0 %1007
      %1009 = vrot.lane.b32.xlu0 %v421, 48
      %v1010 = vpop.permute.xlu0 %1009
      %1011 = vrot.lane.b32.xlu0 %v422, 48
      %v1012 = vpop.permute.xlu0 %1011
      %1013 = vrot.lane.b32.xlu0 %v423, 48
      %v1014 = vpop.permute.xlu0 %1013
      %1015 = vrot.lane.b32.xlu0 %v424, 48
      %v1016 = vpop.permute.xlu0 %1015
      %1017 = vrot.lane.b32.xlu0 %v425, 48
      %v1018 = vpop.permute.xlu0 %1017
      %1019 = vrot.lane.b32.xlu0 %v426, 48
      %v1020 = vpop.permute.xlu0 %1019
      %1021 = vrot.lane.b32.xlu0 %v427, 48
      %v1022 = vpop.permute.xlu0 %1021
      %1023 = vrot.lane.b32.xlu0 %v428, 48
      %v1024 = vpop.permute.xlu0 %1023
      %1025 = vrot.lane.b32.xlu0 %v429, 48
      %v1026 = vpop.permute.xlu0 %1025
      %1027 = vrot.lane.b32.xlu0 %v430, 48
      %v1028 = vpop.permute.xlu0 %1027
      %1029 = vrot.lane.b32.xlu0 %v431, 48
      %v1030 = vpop.permute.xlu0 %1029
      %1031 = vrot.lane.b32.xlu0 %v432, 48
      %v1032 = vpop.permute.xlu0 %1031
      %1033 = vrot.lane.b32.xlu0 %v433, 48
      %v1034 = vpop.permute.xlu0 %1033
      %1035 = vrot.lane.b32.xlu0 %v434, 48
      %v1036 = vpop.permute.xlu0 %1035
      %1037 = vrot.lane.b32.xlu0 %v435, 48
      %v1038 = vpop.permute.xlu0 %1037
      %1039 = vrot.lane.b32.xlu0 %v436, 48
      %v1040 = vpop.permute.xlu0 %1039
      %1041 = vrot.lane.b32.xlu0 %v437, 48
      %v1042 = vpop.permute.xlu0 %1041
      %1043 = vrot.lane.b32.xlu0 %v438, 48
      %v1044 = vpop.permute.xlu0 %1043
      %1045 = vrot.lane.b32.xlu0 %v439, 48
      %v1046 = vpop.permute.xlu0 %1045
      %1047 = vrot.lane.b32.xlu0 %v440, 48
      %v1048 = vpop.permute.xlu0 %1047
      %1049 = vrot.lane.b32.xlu0 %v441, 48
      %v1050 = vpop.permute.xlu0 %1049
      %1115 = vrot.lane.b32.xlu0 %v442, 60
      %v1116 = vpop.permute.xlu0 %1115
      %1117 = vrot.lane.b32.xlu0 %v443, 60
      %v1118 = vpop.permute.xlu0 %1117
      %1119 = vrot.lane.b32.xlu0 %v444, 60
      %v1120 = vpop.permute.xlu0 %1119
      %1121 = vrot.lane.b32.xlu0 %v445, 60
      %v1122 = vpop.permute.xlu0 %1121
      %1123 = vrot.lane.b32.xlu0 %v446, 60
      %v1124 = vpop.permute.xlu0 %1123
      %1125 = vrot.lane.b32.xlu0 %v447, 60
      %v1126 = vpop.permute.xlu0 %1125
      %1127 = vrot.lane.b32.xlu0 %v448, 60
      %v1128 = vpop.permute.xlu0 %1127
      %1129 = vrot.lane.b32.xlu0 %v449, 60
      %v1130 = vpop.permute.xlu0 %1129
      %1131 = vrot.lane.b32.xlu0 %v450, 60
      %v1132 = vpop.permute.xlu0 %1131
      %1133 = vrot.lane.b32.xlu0 %v451, 60
      %v1134 = vpop.permute.xlu0 %1133
      %1135 = vrot.lane.b32.xlu0 %v452, 60
      %v1136 = vpop.permute.xlu0 %1135
      %1137 = vrot.lane.b32.xlu0 %v453, 60
      %v1138 = vpop.permute.xlu0 %1137
      %1139 = vrot.lane.b32.xlu0 %v454, 60
      %v1140 = vpop.permute.xlu0 %1139
      %1141 = vrot.lane.b32.xlu0 %v455, 60
      %v1142 = vpop.permute.xlu0 %1141
      %1143 = vrot.lane.b32.xlu0 %v456, 60
      %v1144 = vpop.permute.xlu0 %1143
      %1145 = vrot.lane.b32.xlu0 %v457, 60
      %v1146 = vpop.permute.xlu0 %1145
      %1147 = vrot.lane.b32.xlu0 %v458, 60
      %v1148 = vpop.permute.xlu0 %1147
      %1149 = vrot.lane.b32.xlu0 %v459, 60
      %v1150 = vpop.permute.xlu0 %1149
      %1151 = vrot.lane.b32.xlu0 %v460, 60
      %v1152 = vpop.permute.xlu0 %1151
      %1153 = vrot.lane.b32.xlu0 %v461, 60
      %v1154 = vpop.permute.xlu0 %1153
      %1155 = vrot.lane.b32.xlu0 %v462, 60
      %v1156 = vpop.permute.xlu0 %1155
      %1157 = vrot.lane.b32.xlu0 %v463, 60
      %v1158 = vpop.permute.xlu0 %1157
      %1159 = vrot.lane.b32.xlu0 %v464, 60
      %v1160 = vpop.permute.xlu0 %1159
      %1161 = vrot.lane.b32.xlu0 %v465, 60
      %v1162 = vpop.permute.xlu0 %1161
      %1163 = vrot.lane.b32.xlu0 %v466, 60
      %v1164 = vpop.permute.xlu0 %1163
      %1165 = vrot.lane.b32.xlu0 %v467, 60
      %v1166 = vpop.permute.xlu0 %1165
      %1167 = vrot.lane.b32.xlu0 %v468, 60
      %v1168 = vpop.permute.xlu0 %1167
      %1169 = vrot.lane.b32.xlu0 %v469, 60
      %v1170 = vpop.permute.xlu0 %1169
      %1171 = vrot.lane.b32.xlu0 %v470, 60
      %v1172 = vpop.permute.xlu0 %1171
      %1173 = vrot.lane.b32.xlu0 %v471, 60
      %v1174 = vpop.permute.xlu0 %1173
      %1175 = vrot.lane.b32.xlu0 %v472, 60
      %v1176 = vpop.permute.xlu0 %1175
      %1177 = vrot.lane.b32.xlu0 %v473, 60
      %v1178 = vpop.permute.xlu0 %1177
      %1243 = vrot.lane.b32.xlu0 %v475, 72
      %v1244 = vpop.permute.xlu0 %1243
      %1245 = vrot.lane.b32.xlu0 %v476, 72
      %v1246 = vpop.permute.xlu0 %1245
      %1247 = vrot.lane.b32.xlu0 %v477, 72
      %v1248 = vpop.permute.xlu0 %1247
      %1249 = vrot.lane.b32.xlu0 %v478, 72
      %v1250 = vpop.permute.xlu0 %1249
      %1251 = vrot.lane.b32.xlu0 %v479, 72
      %v1252 = vpop.permute.xlu0 %1251
      %1253 = vrot.lane.b32.xlu0 %v480, 72
      %v1254 = vpop.permute.xlu0 %1253
      %1255 = vrot.lane.b32.xlu0 %v481, 72
      %v1256 = vpop.permute.xlu0 %1255
      %1257 = vrot.lane.b32.xlu0 %v482, 72
      %v1258 = vpop.permute.xlu0 %1257
      %1259 = vrot.lane.b32.xlu0 %v483, 72
      %v1260 = vpop.permute.xlu0 %1259
      %1261 = vrot.lane.b32.xlu0 %v484, 72
      %v1262 = vpop.permute.xlu0 %1261
      %1263 = vrot.lane.b32.xlu0 %v485, 72
      %v1264 = vpop.permute.xlu0 %1263
      %1265 = vrot.lane.b32.xlu0 %v486, 72
      %v1266 = vpop.permute.xlu0 %1265
      %1267 = vrot.lane.b32.xlu0 %v487, 72
      %v1268 = vpop.permute.xlu0 %1267
      %1269 = vrot.lane.b32.xlu0 %v488, 72
      %v1270 = vpop.permute.xlu0 %1269
      %1271 = vrot.lane.b32.xlu0 %v489, 72
      %v1272 = vpop.permute.xlu0 %1271
      %1273 = vrot.lane.b32.xlu0 %v490, 72
      %v1274 = vpop.permute.xlu0 %1273
      %1275 = vrot.lane.b32.xlu0 %v491, 72
      %v1276 = vpop.permute.xlu0 %1275
      %1277 = vrot.lane.b32.xlu0 %v492, 72
      %v1278 = vpop.permute.xlu0 %1277
      %1279 = vrot.lane.b32.xlu0 %v493, 72
      %v1280 = vpop.permute.xlu0 %1279
      %1281 = vrot.lane.b32.xlu0 %v494, 72
      %v1282 = vpop.permute.xlu0 %1281
      %1283 = vrot.lane.b32.xlu0 %v495, 72
      %v1284 = vpop.permute.xlu0 %1283
      %1285 = vrot.lane.b32.xlu0 %v496, 72
      %v1286 = vpop.permute.xlu0 %1285
      %1287 = vrot.lane.b32.xlu0 %v497, 72
      %v1288 = vpop.permute.xlu0 %1287
      %1289 = vrot.lane.b32.xlu0 %v498, 72
      %v1290 = vpop.permute.xlu0 %1289
      %1291 = vrot.lane.b32.xlu0 %v499, 72
      %v1292 = vpop.permute.xlu0 %1291
      %1293 = vrot.lane.b32.xlu0 %v500, 72
      %v1294 = vpop.permute.xlu0 %1293
      %1295 = vrot.lane.b32.xlu0 %v501, 72
      %v1296 = vpop.permute.xlu0 %1295
      %1297 = vrot.lane.b32.xlu0 %v502, 72
      %v1298 = vpop.permute.xlu0 %1297
      %1299 = vrot.lane.b32.xlu0 %v503, 72
      %v1300 = vpop.permute.xlu0 %1299
      %1301 = vrot.lane.b32.xlu0 %v504, 72
      %v1302 = vpop.permute.xlu0 %1301
      %1303 = vrot.lane.b32.xlu0 %v505, 72
      %v1304 = vpop.permute.xlu0 %1303
      %1305 = vrot.lane.b32.xlu0 %v506, 72
      %v1306 = vpop.permute.xlu0 %1305
      %1371 = vrot.lane.b32.xlu0 %v507, 84
      %v1372 = vpop.permute.xlu0 %1371
      %1373 = vrot.lane.b32.xlu0 %v508, 84
      %v1374 = vpop.permute.xlu0 %1373
      %1375 = vrot.lane.b32.xlu0 %v509, 84
      %v1376 = vpop.permute.xlu0 %1375
      %1377 = vrot.lane.b32.xlu0 %v510, 84
      %v1378 = vpop.permute.xlu0 %1377
      %1379 = vrot.lane.b32.xlu0 %v511, 84
      %v1380 = vpop.permute.xlu0 %1379
      %1381 = vrot.lane.b32.xlu0 %v512, 84
      %v1382 = vpop.permute.xlu0 %1381
      %1383 = vrot.lane.b32.xlu0 %v513, 84
      %v1384 = vpop.permute.xlu0 %1383
      %1385 = vrot.lane.b32.xlu0 %v514, 84
      %v1386 = vpop.permute.xlu0 %1385
      %1387 = vrot.lane.b32.xlu0 %v515, 84
      %v1388 = vpop.permute.xlu0 %1387
      %1389 = vrot.lane.b32.xlu0 %v516, 84
      %v1390 = vpop.permute.xlu0 %1389
      %1391 = vrot.lane.b32.xlu0 %v517, 84
      %v1392 = vpop.permute.xlu0 %1391
      %1393 = vrot.lane.b32.xlu0 %v518, 84
      %v1394 = vpop.permute.xlu0 %1393
      %1395 = vrot.lane.b32.xlu0 %v519, 84
      %v1396 = vpop.permute.xlu0 %1395
      %1397 = vrot.lane.b32.xlu0 %v520, 84
      %v1398 = vpop.permute.xlu0 %1397
      %1399 = vrot.lane.b32.xlu0 %v521, 84
      %v1400 = vpop.permute.xlu0 %1399
      %1401 = vrot.lane.b32.xlu0 %v522, 84
      %v1402 = vpop.permute.xlu0 %1401
      %1403 = vrot.lane.b32.xlu0 %v523, 84
      %v1404 = vpop.permute.xlu0 %1403
      %1405 = vrot.lane.b32.xlu0 %v524, 84
      %v1406 = vpop.permute.xlu0 %1405
      %1407 = vrot.lane.b32.xlu0 %v525, 84
      %v1408 = vpop.permute.xlu0 %1407
      %1409 = vrot.lane.b32.xlu0 %v526, 84
      %v1410 = vpop.permute.xlu0 %1409
      %1411 = vrot.lane.b32.xlu0 %v527, 84
      %v1412 = vpop.permute.xlu0 %1411
      %1413 = vrot.lane.b32.xlu0 %v528, 84
      %v1414 = vpop.permute.xlu0 %1413
      %1415 = vrot.lane.b32.xlu0 %v529, 84
      %v1416 = vpop.permute.xlu0 %1415
      %1417 = vrot.lane.b32.xlu0 %v530, 84
      %v1418 = vpop.permute.xlu0 %1417
      %1419 = vrot.lane.b32.xlu0 %v531, 84
      %v1420 = vpop.permute.xlu0 %1419
      %1421 = vrot.lane.b32.xlu0 %v532, 84
      %v1422 = vpop.permute.xlu0 %1421
      %1423 = vrot.lane.b32.xlu0 %v533, 84
      %v1424 = vpop.permute.xlu0 %1423
      %1425 = vrot.lane.b32.xlu0 %v534, 84
      %v1426 = vpop.permute.xlu0 %1425
      %1427 = vrot.lane.b32.xlu0 %v535, 84
      %v1428 = vpop.permute.xlu0 %1427
      %1429 = vrot.lane.b32.xlu0 %v536, 84
      %v1430 = vpop.permute.xlu0 %1429
      %1431 = vrot.lane.b32.xlu0 %v537, 84
      %v1432 = vpop.permute.xlu0 %1431
      %1433 = vrot.lane.b32.xlu0 %v538, 84
      %v1434 = vpop.permute.xlu0 %1433
      %1499 = vrot.lane.b32.xlu0 %v539, 96
      %v1500 = vpop.permute.xlu0 %1499
      %1501 = vrot.lane.b32.xlu0 %v540, 96
      %v1502 = vpop.permute.xlu0 %1501
      %1503 = vrot.lane.b32.xlu0 %v541, 96
      %v1504 = vpop.permute.xlu0 %1503
      %1505 = vrot.lane.b32.xlu0 %v542, 96
      %v1506 = vpop.permute.xlu0 %1505
      %1507 = vrot.lane.b32.xlu0 %v543, 96
      %v1508 = vpop.permute.xlu0 %1507
      %1509 = vrot.lane.b32.xlu0 %v544, 96
      %v1510 = vpop.permute.xlu0 %1509
      %1511 = vrot.lane.b32.xlu0 %v545, 96
      %v1512 = vpop.permute.xlu0 %1511
      %1513 = vrot.lane.b32.xlu0 %v546, 96
      %v1514 = vpop.permute.xlu0 %1513
      %1515 = vrot.lane.b32.xlu0 %v547, 96
      %v1516 = vpop.permute.xlu0 %1515
      %1517 = vrot.lane.b32.xlu0 %v548, 96
      %v1518 = vpop.permute.xlu0 %1517
      %1519 = vrot.lane.b32.xlu0 %v549, 96
      %v1520 = vpop.permute.xlu0 %1519
      %1521 = vrot.lane.b32.xlu0 %v550, 96
      %v1522 = vpop.permute.xlu0 %1521
      %1523 = vrot.lane.b32.xlu0 %v551, 96
      %v1524 = vpop.permute.xlu0 %1523
      %1525 = vrot.lane.b32.xlu0 %v552, 96
      %v1526 = vpop.permute.xlu0 %1525
      %1527 = vrot.lane.b32.xlu0 %v553, 96
      %v1528 = vpop.permute.xlu0 %1527
      %1529 = vrot.lane.b32.xlu0 %v554, 96
      %v1530 = vpop.permute.xlu0 %1529
      %1531 = vrot.lane.b32.xlu0 %v555, 96
      %v1532 = vpop.permute.xlu0 %1531
      %1533 = vrot.lane.b32.xlu0 %v556, 96
      %v1534 = vpop.permute.xlu0 %1533
      %1535 = vrot.lane.b32.xlu0 %v557, 96
      %v1536 = vpop.permute.xlu0 %1535
      %1537 = vrot.lane.b32.xlu0 %v558, 96
      %v1538 = vpop.permute.xlu0 %1537
      %1539 = vrot.lane.b32.xlu0 %v559, 96
      %v1540 = vpop.permute.xlu0 %1539
      %1541 = vrot.lane.b32.xlu0 %v560, 96
      %v1542 = vpop.permute.xlu0 %1541
      %1543 = vrot.lane.b32.xlu0 %v561, 96
      %v1544 = vpop.permute.xlu0 %1543
      %1545 = vrot.lane.b32.xlu0 %v562, 96
      %v1546 = vpop.permute.xlu0 %1545
      %1547 = vrot.lane.b32.xlu0 %v563, 96
      %v1548 = vpop.permute.xlu0 %1547
      %1549 = vrot.lane.b32.xlu0 %v564, 96
      %v1550 = vpop.permute.xlu0 %1549
      %1551 = vrot.lane.b32.xlu0 %v565, 96
      %v1552 = vpop.permute.xlu0 %1551
      %1553 = vrot.lane.b32.xlu0 %v566, 96
      %v1554 = vpop.permute.xlu0 %1553
      %1555 = vrot.lane.b32.xlu0 %v567, 96
      %v1556 = vpop.permute.xlu0 %1555
      %1557 = vrot.lane.b32.xlu0 %v568, 96
      %v1558 = vpop.permute.xlu0 %1557
      %1559 = vrot.lane.b32.xlu0 %v569, 96
      %v1560 = vpop.permute.xlu0 %1559
      %1561 = vrot.lane.b32.xlu0 %v570, 96
      %v1562 = vpop.permute.xlu0 %1561
      %v1595 = vsel %vm171, %v282, %v604
      %v1596 = vsel %vm171, %v283, %v606
      %v1597 = vsel %vm171, %v284, %v608
      %v1598 = vsel %vm171, %v285, %v610
      %v1599 = vsel %vm171, %v286, %v612
      %v1600 = vsel %vm171, %v287, %v614
      %v1601 = vsel %vm171, %v288, %v616
      %v1602 = vsel %vm171, %v289, %v618
      %v1603 = vsel %vm171, %v290, %v620
      %v1604 = vsel %vm171, %v291, %v622
      %v1605 = vsel %vm171, %v292, %v624
      %v1606 = vsel %vm171, %v293, %v626
      %v1607 = vsel %vm171, %v294, %v628
      %v1608 = vsel %vm171, %v295, %v630
      %v1609 = vsel %vm171, %v296, %v632
      %v1610 = vsel %vm171, %v297, %v634
      %v1611 = vsel %vm171, %v298, %v636
      %v1612 = vsel %vm171, %v299, %v638
      %v1613 = vsel %vm171, %v300, %v640
      %v1614 = vsel %vm171, %v301, %v642
      %v1615 = vsel %vm171, %v302, %v644
      %v1616 = vsel %vm171, %v303, %v646
      %v1617 = vsel %vm171, %v304, %v648
      %v1618 = vsel %vm171, %v305, %v650
      %v1619 = vsel %vm171, %v306, %v652
      %v1620 = vsel %vm171, %v307, %v654
      %v1621 = vsel %vm171, %v308, %v656
      %v1622 = vsel %vm171, %v309, %v658
      %v1623 = vsel %vm171, %v310, %v660
      %v1624 = vsel %vm171, %v311, %v662
      %v1625 = vsel %vm171, %v312, %v664
      %v1626 = vsel %vm171, %v313, %v666
      %vm1627 = vcmask 195584
      %v1628 = vsel %vm1627, %v1595, %v732
      %v1629 = vsel %vm1627, %v1596, %v734
      %v1630 = vsel %vm1627, %v1597, %v736
      %v1631 = vsel %vm1627, %v1598, %v738
      %v1632 = vsel %vm1627, %v1599, %v740
      %v1633 = vsel %vm1627, %v1600, %v742
      %v1634 = vsel %vm1627, %v1601, %v744
      %v1635 = vsel %vm1627, %v1602, %v746
      %v1636 = vsel %vm1627, %v1603, %v748
      %v1637 = vsel %vm1627, %v1604, %v750
      %v1638 = vsel %vm1627, %v1605, %v752
      %v1639 = vsel %vm1627, %v1606, %v754
      %v1640 = vsel %vm1627, %v1607, %v756
      %v1641 = vsel %vm1627, %v1608, %v758
      %v1642 = vsel %vm1627, %v1609, %v760
      %v1643 = vsel %vm1627, %v1610, %v762
      %v1644 = vsel %vm1627, %v1611, %v764
      %v1645 = vsel %vm1627, %v1612, %v766
      %v1646 = vsel %vm1627, %v1613, %v768
      %v1647 = vsel %vm1627, %v1614, %v770
      %v1648 = vsel %vm1627, %v1615, %v772
      %v1649 = vsel %vm1627, %v1616, %v774
      %v1650 = vsel %vm1627, %v1617, %v776
      %v1651 = vsel %vm1627, %v1618, %v778
      %v1652 = vsel %vm1627, %v1619, %v780
      %v1653 = vsel %vm1627, %v1620, %v782
      %v1654 = vsel %vm1627, %v1621, %v784
      %v1655 = vsel %vm1627, %v1622, %v786
      %v1656 = vsel %vm1627, %v1623, %v788
      %v1657 = vsel %vm1627, %v1624, %v790
      %v1658 = vsel %vm1627, %v1625, %v792
      %v1659 = vsel %vm1627, %v1626, %v794
      %vm1660 = vcmask 293888
      %v1661 = vsel %vm1660, %v1628, %v860
      %v1662 = vsel %vm1660, %v1629, %v862
      %v1663 = vsel %vm1660, %v1630, %v864
      %v1664 = vsel %vm1660, %v1631, %v866
      %v1665 = vsel %vm1660, %v1632, %v868
      %v1666 = vsel %vm1660, %v1633, %v870
      %v1667 = vsel %vm1660, %v1634, %v872
      %v1668 = vsel %vm1660, %v1635, %v874
      %v1669 = vsel %vm1660, %v1636, %v876
      %v1670 = vsel %vm1660, %v1637, %v878
      %v1671 = vsel %vm1660, %v1638, %v880
      %v1672 = vsel %vm1660, %v1639, %v882
      %v1673 = vsel %vm1660, %v1640, %v884
      %v1674 = vsel %vm1660, %v1641, %v886
      %v1675 = vsel %vm1660, %v1642, %v888
      %v1676 = vsel %vm1660, %v1643, %v890
      %v1677 = vsel %vm1660, %v1644, %v892
      %v1678 = vsel %vm1660, %v1645, %v894
      %v1679 = vsel %vm1660, %v1646, %v896
      %v1680 = vsel %vm1660, %v1647, %v898
      %v1681 = vsel %vm1660, %v1648, %v900
      %v1682 = vsel %vm1660, %v1649, %v902
      %v1683 = vsel %vm1660, %v1650, %v904
      %v1684 = vsel %vm1660, %v1651, %v906
      %v1685 = vsel %vm1660, %v1652, %v908
      %v1686 = vsel %vm1660, %v1653, %v910
      %v1687 = vsel %vm1660, %v1654, %v912
      %v1688 = vsel %vm1660, %v1655, %v914
      %v1689 = vsel %vm1660, %v1656, %v916
      %v1690 = vsel %vm1660, %v1657, %v918
      %v1691 = vsel %vm1660, %v1658, %v920
      %v1692 = vsel %vm1660, %v1659, %v922
      %vm1693 = vcmask 392192
      %v1694 = vsel %vm1693, %v1661, %v988
      %v1695 = vsel %vm1693, %v1662, %v990
      %v1696 = vsel %vm1693, %v1663, %v992
      %v1697 = vsel %vm1693, %v1664, %v994
      %v1698 = vsel %vm1693, %v1665, %v996
      %v1699 = vsel %vm1693, %v1666, %v998
      %v1700 = vsel %vm1693, %v1667, %v1000
      %v1701 = vsel %vm1693, %v1668, %v1002
      %v1702 = vsel %vm1693, %v1669, %v1004
      %v1703 = vsel %vm1693, %v1670, %v1006
      %v1704 = vsel %vm1693, %v1671, %v1008
      %v1705 = vsel %vm1693, %v1672, %v1010
      %v1706 = vsel %vm1693, %v1673, %v1012
      %v1707 = vsel %vm1693, %v1674, %v1014
      %v1708 = vsel %vm1693, %v1675, %v1016
      %v1709 = vsel %vm1693, %v1676, %v1018
      %v1710 = vsel %vm1693, %v1677, %v1020
      %v1711 = vsel %vm1693, %v1678, %v1022
      %v1712 = vsel %vm1693, %v1679, %v1024
      %v1713 = vsel %vm1693, %v1680, %v1026
      %v1714 = vsel %vm1693, %v1681, %v1028
      %v1715 = vsel %vm1693, %v1682, %v1030
      %v1716 = vsel %vm1693, %v1683, %v1032
      %v1717 = vsel %vm1693, %v1684, %v1034
      %v1718 = vsel %vm1693, %v1685, %v1036
      %v1719 = vsel %vm1693, %v1686, %v1038
      %v1720 = vsel %vm1693, %v1687, %v1040
      %v1721 = vsel %vm1693, %v1688, %v1042
      %v1722 = vsel %vm1693, %v1689, %v1044
      %v1723 = vsel %vm1693, %v1690, %v1046
      %v1724 = vsel %vm1693, %v1691, %v1048
      %v1725 = vsel %vm1693, %v1692, %v1050
      %vm1726 = vcmask 490496
      %v1727 = vsel %vm1726, %v1694, %v1116
      %v1728 = vsel %vm1726, %v1695, %v1118
      %v1729 = vsel %vm1726, %v1696, %v1120
      %v1730 = vsel %vm1726, %v1697, %v1122
      %v1731 = vsel %vm1726, %v1698, %v1124
      %v1732 = vsel %vm1726, %v1699, %v1126
      %v1733 = vsel %vm1726, %v1700, %v1128
      %v1734 = vsel %vm1726, %v1701, %v1130
      %v1735 = vsel %vm1726, %v1702, %v1132
      %v1736 = vsel %vm1726, %v1703, %v1134
      %v1737 = vsel %vm1726, %v1704, %v1136
      %v1738 = vsel %vm1726, %v1705, %v1138
      %v1739 = vsel %vm1726, %v1706, %v1140
      %v1740 = vsel %vm1726, %v1707, %v1142
      %v1741 = vsel %vm1726, %v1708, %v1144
      %v1742 = vsel %vm1726, %v1709, %v1146
      %v1743 = vsel %vm1726, %v1710, %v1148
      %v1744 = vsel %vm1726, %v1711, %v1150
      %v1745 = vsel %vm1726, %v1712, %v1152
      %v1746 = vsel %vm1726, %v1713, %v1154
      %v1747 = vsel %vm1726, %v1714, %v1156
      %v1748 = vsel %vm1726, %v1715, %v1158
      %v1749 = vsel %vm1726, %v1716, %v1160
      %v1750 = vsel %vm1726, %v1717, %v1162
      %v1751 = vsel %vm1726, %v1718, %v1164
      %v1752 = vsel %vm1726, %v1719, %v1166
      %v1753 = vsel %vm1726, %v1720, %v1168
      %v1754 = vsel %vm1726, %v1721, %v1170
      %v1755 = vsel %vm1726, %v1722, %v1172
      %v1756 = vsel %vm1726, %v1723, %v1174
      %v1757 = vsel %vm1726, %v1724, %v1176
      %v1758 = vsel %vm1726, %v1725, %v1178
      %vm1759 = vcmask 588800
      %v1760 = vsel %vm1759, %v1727, %v1244
      %v1761 = vsel %vm1759, %v1728, %v1246
      %v1762 = vsel %vm1759, %v1729, %v1248
      %v1763 = vsel %vm1759, %v1730, %v1250
      %v1764 = vsel %vm1759, %v1731, %v1252
      %v1765 = vsel %vm1759, %v1732, %v1254
      %v1766 = vsel %vm1759, %v1733, %v1256
      %v1767 = vsel %vm1759, %v1734, %v1258
      %v1768 = vsel %vm1759, %v1735, %v1260
      %v1769 = vsel %vm1759, %v1736, %v1262
      %v1770 = vsel %vm1759, %v1737, %v1264
      %v1771 = vsel %vm1759, %v1738, %v1266
      %v1772 = vsel %vm1759, %v1739, %v1268
      %v1773 = vsel %vm1759, %v1740, %v1270
      %v1774 = vsel %vm1759, %v1741, %v1272
      %v1775 = vsel %vm1759, %v1742, %v1274
      %v1776 = vsel %vm1759, %v1743, %v1276
      %v1777 = vsel %vm1759, %v1744, %v1278
      %v1778 = vsel %vm1759, %v1745, %v1280
      %v1779 = vsel %vm1759, %v1746, %v1282
      %v1780 = vsel %vm1759, %v1747, %v1284
      %v1781 = vsel %vm1759, %v1748, %v1286
      %v1782 = vsel %vm1759, %v1749, %v1288
      %v1783 = vsel %vm1759, %v1750, %v1290
      %v1784 = vsel %vm1759, %v1751, %v1292
      %v1785 = vsel %vm1759, %v1752, %v1294
      %v1786 = vsel %vm1759, %v1753, %v1296
      %v1787 = vsel %vm1759, %v1754, %v1298
      %v1788 = vsel %vm1759, %v1755, %v1300
      %v1789 = vsel %vm1759, %v1756, %v1302
      %v1790 = vsel %vm1759, %v1757, %v1304
      %v1791 = vsel %vm1759, %v1758, %v1306
      %vm1792 = vcmask 687104
      %v1793 = vsel %vm1792, %v1760, %v1372
      %v1794 = vsel %vm1792, %v1761, %v1374
      %v1795 = vsel %vm1792, %v1762, %v1376
      %v1796 = vsel %vm1792, %v1763, %v1378
      %v1797 = vsel %vm1792, %v1764, %v1380
      %v1798 = vsel %vm1792, %v1765, %v1382
      %v1799 = vsel %vm1792, %v1766, %v1384
      %v1800 = vsel %vm1792, %v1767, %v1386
      %v1801 = vsel %vm1792, %v1768, %v1388
      %v1802 = vsel %vm1792, %v1769, %v1390
      %v1803 = vsel %vm1792, %v1770, %v1392
      %v1804 = vsel %vm1792, %v1771, %v1394
      %v1805 = vsel %vm1792, %v1772, %v1396
      %v1806 = vsel %vm1792, %v1773, %v1398
      %v1807 = vsel %vm1792, %v1774, %v1400
      %v1808 = vsel %vm1792, %v1775, %v1402
      %v1809 = vsel %vm1792, %v1776, %v1404
      %v1810 = vsel %vm1792, %v1777, %v1406
      %v1811 = vsel %vm1792, %v1778, %v1408
      %v1812 = vsel %vm1792, %v1779, %v1410
      %v1813 = vsel %vm1792, %v1780, %v1412
      %v1814 = vsel %vm1792, %v1781, %v1414
      %v1815 = vsel %vm1792, %v1782, %v1416
      %v1816 = vsel %vm1792, %v1783, %v1418
      %v1817 = vsel %vm1792, %v1784, %v1420
      %v1818 = vsel %vm1792, %v1785, %v1422
      %v1819 = vsel %vm1792, %v1786, %v1424
      %v1820 = vsel %vm1792, %v1787, %v1426
      %v1821 = vsel %vm1792, %v1788, %v1428
      %v1822 = vsel %vm1792, %v1789, %v1430
      %v1823 = vsel %vm1792, %v1790, %v1432
      %v1824 = vsel %vm1792, %v1791, %v1434
      %vm1825 = vcmask 785408
      %v1826 = vsel %vm1825, %v1793, %v1500
      %v1827 = vsel %vm1825, %v1794, %v1502
      %v1828 = vsel %vm1825, %v1795, %v1504
      %v1829 = vsel %vm1825, %v1796, %v1506
      %v1830 = vsel %vm1825, %v1797, %v1508
      %v1831 = vsel %vm1825, %v1798, %v1510
      %v1832 = vsel %vm1825, %v1799, %v1512
      %v1833 = vsel %vm1825, %v1800, %v1514
      %v1834 = vsel %vm1825, %v1801, %v1516
      %v1835 = vsel %vm1825, %v1802, %v1518
      %v1836 = vsel %vm1825, %v1803, %v1520
      %v1837 = vsel %vm1825, %v1804, %v1522
      %v1838 = vsel %vm1825, %v1805, %v1524
      %v1839 = vsel %vm1825, %v1806, %v1526
      %v1840 = vsel %vm1825, %v1807, %v1528
      %v1841 = vsel %vm1825, %v1808, %v1530
      %v1842 = vsel %vm1825, %v1809, %v1532
      %v1843 = vsel %vm1825, %v1810, %v1534
      %v1844 = vsel %vm1825, %v1811, %v1536
      %v1845 = vsel %vm1825, %v1812, %v1538
      %v1846 = vsel %vm1825, %v1813, %v1540
      %v1847 = vsel %vm1825, %v1814, %v1542
      %v1848 = vsel %vm1825, %v1815, %v1544
      %v1849 = vsel %vm1825, %v1816, %v1546
      %v1850 = vsel %vm1825, %v1817, %v1548
      %v1851 = vsel %vm1825, %v1818, %v1550
      %v1852 = vsel %vm1825, %v1819, %v1552
      %v1853 = vsel %vm1825, %v1820, %v1554
      %v1854 = vsel %vm1825, %v1821, %v1556
      %v1855 = vsel %vm1825, %v1822, %v1558
      %v1856 = vsel %vm1825, %v1823, %v1560
      %v1857 = vsel %vm1825, %v1824, %v1562
      %v1858 = vld [vmem:[%s1] sm:$0xff]
      %v1859 = vld [vmem:[%s1 + $0x8] sm:$0xff]
      %v1860 = vld [vmem:[%s1 + $0x10] sm:$0xff]
      %v1861 = vld [vmem:[%s1 + $0x18] sm:$0xff]
      %v1862 = vld [vmem:[%s1 + $0x20] sm:$0xff]
      %v1863 = vld [vmem:[%s1 + $0x28] sm:$0xff]
      %v1864 = vld [vmem:[%s1 + $0x30] sm:$0xff]
      %v1865 = vld [vmem:[%s1 + $0x38] sm:$0xff]
      %v1866 = vld [vmem:[%s1 + $0x40] sm:$0xff]
      %v1867 = vld [vmem:[%s1 + $0x48] sm:$0xff]
      %v1868 = vld [vmem:[%s1 + $0x50] sm:$0xff]
      %v1869 = vld [vmem:[%s1 + $0x58] sm:$0xff]
      %v1870 = vld [vmem:[%s1 + $0x60] sm:$0xff]
      %v1871 = vld [vmem:[%s1 + $0x68] sm:$0xf]
      %v1872 = vld [vmem:[%s2] sm:$0x1]
      %v1874 = vlaneseq
      %v1875 = vshrl.u32 %v1874, 7
      %v1876 = vsub.s32 0, %v1875
      %v1877 = vrot.slane %v1872, %v1876
      %vm1879 = vcmask 883712
      %v1881 = vsel %vm1879, %v1826, 0
      %v1884 = vsel %vm1879, %v1827, 0
      %v1887 = vsel %vm1879, %v1828, 0
      %v1890 = vsel %vm1879, %v1829, 0
      %v1893 = vsel %vm1879, %v1830, 0
      %v1896 = vsel %vm1879, %v1831, 0
      %v1899 = vsel %vm1879, %v1832, 0
      %v1902 = vsel %vm1879, %v1833, 0
      %v1905 = vsel %vm1879, %v1834, 0
      %v1908 = vsel %vm1879, %v1835, 0
      %v1911 = vsel %vm1879, %v1836, 0
      %v1914 = vsel %vm1879, %v1837, 0
      %v1917 = vsel %vm1879, %v1838, 0
      %v1920 = vsel %vm1879, %v1839, 0
      %v1923 = vsel %vm1879, %v1840, 0
      %v1926 = vsel %vm1879, %v1841, 0
      %v1929 = vsel %vm1879, %v1842, 0
      %v1932 = vsel %vm1879, %v1843, 0
      %v1935 = vsel %vm1879, %v1844, 0
      %v1938 = vsel %vm1879, %v1845, 0
      %v1941 = vsel %vm1879, %v1846, 0
      %v1944 = vsel %vm1879, %v1847, 0
      %v1947 = vsel %vm1879, %v1848, 0
      %v1950 = vsel %vm1879, %v1849, 0
      %v1953 = vsel %vm1879, %v1850, 0
      %v1956 = vsel %vm1879, %v1851, 0
      %v1959 = vsel %vm1879, %v1852, 0
      %v1962 = vsel %vm1879, %v1853, 0
      %v1965 = vsel %vm1879, %v1854, 0
      %v1968 = vsel %vm1879, %v1855, 0
      %v1971 = vsel %vm1879, %v1856, 0
      %v1974 = vsel %vm1879, %v1857, 0
      %vm1976 = vcmask 1043456
      %v1978 = vsel %vm1976, %v1871, 0
      %1980 = vmatprep.subr.mxu0 0.0
      %1981 = vmatpush1.msra.mxu0 %v1858
      %1982 = vmatprep.subr.mxu0 0.0
      %1983 = vmatpush1.msra.mxu0 %v1859
      %1984 = vmatprep.subr.mxu0 0.0
      %1985 = vmatpush1.msra.mxu0 %v1860
      %1986 = vmatprep.subr.mxu0 0.0
      %1987 = vmatpush1.msra.mxu0 %v1861
      %1988 = vmatprep.subr.mxu0 0.0
      %1989 = vmatpush1.msra.mxu0 %v1862
      %1990 = vmatprep.subr.mxu0 0.0
      %1991 = vmatpush1.msra.mxu0 %v1863
      %1992 = vmatprep.subr.mxu0 0.0
      %1993 = vmatpush1.msra.mxu0 %v1864
      %1994 = vmatprep.subr.mxu0 0.0
      %1995 = vmatpush1.msra.mxu0 %v1865
      %1996 = vmatprep.subr.mxu0 0.0
      %1997 = vmatpush1.msra.mxu0 %v1866
      %1998 = vmatprep.subr.mxu0 0.0
      %1999 = vmatpush1.msra.mxu0 %v1867
      %2000 = vmatprep.subr.mxu0 0.0
      %2001 = vmatpush1.msra.mxu0 %v1868
      %2002 = vmatprep.subr.mxu0 0.0
      %2003 = vmatpush1.msra.mxu0 %v1869
      %2004 = vmatprep.subr.mxu0 0.0
      %2005 = vmatpush1.msra.mxu0 %v1870
      %2006 = vmatprep.subr.mxu0 0.0
      %2007 = vmatpush1.msra.mxu0 %v1978
      %2008 = vmatprep.subr.mxu0 0.0
      %2009 = vmatpush1.msra.mxu0 0.0
      %2010 = vmatprep.subr.mxu0 0.0
      %2011 = vmatpush1.msra.mxu0 0.0
      %2012 = vmatprep.subr.mxu0 0.0
      %2013 = vmatpush1.msra.mxu0 0.0
      %2014 = vmatprep.subr.mxu0 0.0
      %2015 = vmatpush1.msra.mxu0 0.0
      %2016 = vmatprep.subr.mxu0 0.0
      %2017 = vmatpush1.msra.mxu0 0.0
      %2018 = vmatprep.subr.mxu0 0.0
      %2019 = vmatpush1.msra.mxu0 0.0
      %2020 = vmatprep.subr.mxu0 0.0
      %2021 = vmatpush1.msra.mxu0 0.0
      %2022 = vmatprep.subr.mxu0 0.0
      %2023 = vmatpush1.msra.mxu0 0.0
      %2024 = vmatprep.subr.mxu0 0.0
      %2025 = vmatpush1.msra.mxu0 0.0
      %2026 = vmatprep.subr.mxu0 0.0
      %2027 = vmatpush1.msra.mxu0 0.0
      %2028 = vmatprep.subr.mxu0 0.0
      %2029 = vmatpush1.msra.mxu0 0.0
      %2030 = vmatprep.subr.mxu0 0.0
      %2031 = vmatpush1.msra.mxu0 0.0
      %2032 = vmatprep.subr.mxu0 0.0
      %2033 = vmatpush1.msra.mxu0 0.0
      %2034 = vmatprep.subr.mxu0 0.0
      %2035 = vmatpush1.msra.mxu0 0.0
      %2036 = vmatprep.subr.mxu0 0.0
      %2037 = vmatpush1.msra.mxu0 0.0
      %2038 = vmatprep.subr.mxu0 0.0
      %2039 = vmatpush1.msra.mxu0 0.0
      %2040 = vmatprep.subr.mxu0 0.0
      %2041 = vmatpush1.msra.mxu0 0.0
      %2042 = vmatprep.subr.mxu0 0.0
      %2043 = vmatpush1.msra.mxu0 0.0
      %2044 = vmatprep.mubr.f32.mxu0 0.0
      %2045 = vmatmul.mubr.f32.gmra.mrb[0].mxu0 %v1881
      %v2046 = vpop.f32.mrb[0].mxu0
      %v2047 = vadd.f32 %v1877, %v2046
      %v2048 = vpop.f32.mrb[0].mxu0
      %2049 = vmatprep.mubr.f32.mxu0 0.0
      %2050 = vmatmul.mubr.f32.gmra.mrb[0].mxu0 %v1884
      %v2051 = vpop.f32.mrb[0].mxu0
      %v2052 = vadd.f32 %v1877, %v2051
      %v2053 = vpop.f32.mrb[0].mxu0
      %2054 = vmatprep.mubr.f32.mxu0 0.0
      %2055 = vmatmul.mubr.f32.gmra.mrb[0].mxu0 %v1887
      %v2056 = vpop.f32.mrb[0].mxu0
      %v2057 = vadd.f32 %v1877, %v2056
      %v2058 = vpop.f32.mrb[0].mxu0
      %2059 = vmatprep.mubr.f32.mxu0 0.0
      %2060 = vmatmul.mubr.f32.gmra.mrb[0].mxu0 %v1890
      %v2061 = vpop.f32.mrb[0].mxu0
      %v2062 = vadd.f32 %v1877, %v2061
      %v2063 = vpop.f32.mrb[0].mxu0
      %2064 = vmatprep.mubr.f32.mxu0 0.0
      %2065 = vmatmul.mubr.f32.gmra.mrb[0].mxu0 %v1893
      %v2066 = vpop.f32.mrb[0].mxu0
      %v2067 = vadd.f32 %v1877, %v2066
      %v2068 = vpop.f32.mrb[0].mxu0
      %2069 = vmatprep.mubr.f32.mxu0 0.0
      %2070 = vmatmul.mubr.f32.gmra.mrb[0].mxu0 %v1896
      %v2071 = vpop.f32.mrb[0].mxu0
      %v2072 = vadd.f32 %v1877, %v2071
      %v2073 = vpop.f32.mrb[0].mxu0
      %2074 = vmatprep.mubr.f32.mxu0 0.0
      %2075 = vmatmul.mubr.f32.gmra.mrb[0].mxu0 %v1899
      %v2076 = vpop.f32.mrb[0].mxu0
      %v2077 = vadd.f32 %v1877, %v2076
      %v2078 = vpop.f32.mrb[0].mxu0
      %2079 = vmatprep.mubr.f32.mxu0 0.0
      %2080 = vmatmul.mubr.f32.gmra.mrb[0].mxu0 %v1902
      %v2081 = vpop.f32.mrb[0].mxu0
      %v2082 = vadd.f32 %v1877, %v2081
      %v2083 = vpop.f32.mrb[0].mxu0
      %2084 = vmatprep.mubr.f32.mxu0 0.0
      %2085 = vmatmul.mubr.f32.gmra.mrb[0].mxu0 %v1905
      %v2086 = vpop.f32.mrb[0].mxu0
      %v2087 = vadd.f32 %v1877, %v2086
      %v2088 = vpop.f32.mrb[0].mxu0
      %2089 = vmatprep.mubr.f32.mxu0 0.0
      %2090 = vmatmul.mubr.f32.gmra.mrb[0].mxu0 %v1908
      %v2091 = vpop.f32.mrb[0].mxu0
      %v2092 = vadd.f32 %v1877, %v2091
      %v2093 = vpop.f32.mrb[0].mxu0
      %2094 = vmatprep.mubr.f32.mxu0 0.0
      %2095 = vmatmul.mubr.f32.gmra.mrb[0].mxu0 %v1911
      %v2096 = vpop.f32.mrb[0].mxu0
      %v2097 = vadd.f32 %v1877, %v2096
      %v2098 = vpop.f32.mrb[0].mxu0
      %2099 = vmatprep.mubr.f32.mxu0 0.0
      %2100 = vmatmul.mubr.f32.gmra.mrb[0].mxu0 %v1914
      %v2101 = vpop.f32.mrb[0].mxu0
      %v2102 = vadd.f32 %v1877, %v2101
      %v2103 = vpop.f32.mrb[0].mxu0
      %2104 = vmatprep.mubr.f32.mxu0 0.0
      %2105 = vmatmul.mubr.f32.gmra.mrb[0].mxu0 %v1917
      %v2106 = vpop.f32.mrb[0].mxu0
      %v2107 = vadd.f32 %v1877, %v2106
      %v2108 = vpop.f32.mrb[0].mxu0
      %2109 = vmatprep.mubr.f32.mxu0 0.0
      %2110 = vmatmul.mubr.f32.gmra.mrb[0].mxu0 %v1920
      %v2111 = vpop.f32.mrb[0].mxu0
      %v2112 = vadd.f32 %v1877, %v2111
      %v2113 = vpop.f32.mrb[0].mxu0
      %2114 = vmatprep.mubr.f32.mxu0 0.0
      %2115 = vmatmul.mubr.f32.gmra.mrb[0].mxu0 %v1923
      %v2116 = vpop.f32.mrb[0].mxu0
      %v2117 = vadd.f32 %v1877, %v2116
      %v2118 = vpop.f32.mrb[0].mxu0
      %2119 = vmatprep.mubr.f32.mxu0 0.0
      %2120 = vmatmul.mubr.f32.gmra.mrb[0].mxu0 %v1926
      %v2121 = vpop.f32.mrb[0].mxu0
      %v2122 = vadd.f32 %v1877, %v2121
      %v2123 = vpop.f32.mrb[0].mxu0
      %2124 = vmatprep.mubr.f32.mxu0 0.0
      %2125 = vmatmul.mubr.f32.gmra.mrb[0].mxu0 %v1929
      %v2126 = vpop.f32.mrb[0].mxu0
      %v2127 = vadd.f32 %v1877, %v2126
      %v2128 = vpop.f32.mrb[0].mxu0
      %2129 = vmatprep.mubr.f32.mxu0 0.0
      %2130 = vmatmul.mubr.f32.gmra.mrb[0].mxu0 %v1932
      %v2131 = vpop.f32.mrb[0].mxu0
      %v2132 = vadd.f32 %v1877, %v2131
      %v2133 = vpop.f32.mrb[0].mxu0
      %2134 = vmatprep.mubr.f32.mxu0 0.0
      %2135 = vmatmul.mubr.f32.gmra.mrb[0].mxu0 %v1935
      %v2136 = vpop.f32.mrb[0].mxu0
      %v2137 = vadd.f32 %v1877, %v2136
      %v2138 = vpop.f32.mrb[0].mxu0
      %2139 = vmatprep.mubr.f32.mxu0 0.0
      %2140 = vmatmul.mubr.f32.gmra.mrb[0].mxu0 %v1938
      %v2141 = vpop.f32.mrb[0].mxu0
      %v2142 = vadd.f32 %v1877, %v2141
      %v2143 = vpop.f32.mrb[0].mxu0
      %2144 = vmatprep.mubr.f32.mxu0 0.0
      %2145 = vmatmul.mubr.f32.gmra.mrb[0].mxu0 %v1941
      %v2146 = vpop.f32.mrb[0].mxu0
      %v2147 = vadd.f32 %v1877, %v2146
      %v2148 = vpop.f32.mrb[0].mxu0
      %2149 = vmatprep.mubr.f32.mxu0 0.0
      %2150 = vmatmul.mubr.f32.gmra.mrb[0].mxu0 %v1944
      %v2151 = vpop.f32.mrb[0].mxu0
      %v2152 = vadd.f32 %v1877, %v2151
      %v2153 = vpop.f32.mrb[0].mxu0
      %2154 = vmatprep.mubr.f32.mxu0 0.0
      %2155 = vmatmul.mubr.f32.gmra.mrb[0].mxu0 %v1947
      %v2156 = vpop.f32.mrb[0].mxu0
      %v2157 = vadd.f32 %v1877, %v2156
      %v2158 = vpop.f32.mrb[0].mxu0
      %2159 = vmatprep.mubr.f32.mxu0 0.0
      %2160 = vmatmul.mubr.f32.gmra.mrb[0].mxu0 %v1950
      %v2161 = vpop.f32.mrb[0].mxu0
      %v2162 = vadd.f32 %v1877, %v2161
      %v2163 = vpop.f32.mrb[0].mxu0
      %2164 = vmatprep.mubr.f32.mxu0 0.0
      %2165 = vmatmul.mubr.f32.gmra.mrb[0].mxu0 %v1953
      %v2166 = vpop.f32.mrb[0].mxu0
      %v2167 = vadd.f32 %v1877, %v2166
      %v2168 = vpop.f32.mrb[0].mxu0
      %2169 = vmatprep.mubr.f32.mxu0 0.0
      %2170 = vmatmul.mubr.f32.gmra.mrb[0].mxu0 %v1956
      %v2171 = vpop.f32.mrb[0].mxu0
      %v2172 = vadd.f32 %v1877, %v2171
      %v2173 = vpop.f32.mrb[0].mxu0
      %2174 = vmatprep.mubr.f32.mxu0 0.0
      %2175 = vmatmul.mubr.f32.gmra.mrb[0].mxu0 %v1959
      %v2176 = vpop.f32.mrb[0].mxu0
      %v2177 = vadd.f32 %v1877, %v2176
      %v2178 = vpop.f32.mrb[0].mxu0
      %2179 = vmatprep.mubr.f32.mxu0 0.0
      %2180 = vmatmul.mubr.f32.gmra.mrb[0].mxu0 %v1962
      %v2181 = vpop.f32.mrb[0].mxu0
      %v2182 = vadd.f32 %v1877, %v2181
      %v2183 = vpop.f32.mrb[0].mxu0
      %2184 = vmatprep.mubr.f32.mxu0 0.0
      %2185 = vmatmul.mubr.f32.gmra.mrb[0].mxu0 %v1965
      %v2186 = vpop.f32.mrb[0].mxu0
      %v2187 = vadd.f32 %v1877, %v2186
      %v2188 = vpop.f32.mrb[0].mxu0
      %2189 = vmatprep.mubr.f32.mxu0 0.0
      %2190 = vmatmul.mubr.f32.gmra.mrb[0].mxu0 %v1968
      %v2191 = vpop.f32.mrb[0].mxu0
      %v2192 = vadd.f32 %v1877, %v2191
      %v2193 = vpop.f32.mrb[0].mxu0
      %2194 = vmatprep.mubr.f32.mxu0 0.0
      %2195 = vmatmul.mubr.f32.gmra.mrb[0].mxu0 %v1971
      %v2196 = vpop.f32.mrb[0].mxu0
      %v2197 = vadd.f32 %v1877, %v2196
      %v2198 = vpop.f32.mrb[0].mxu0
      %2199 = vmatprep.mubr.f32.mxu0 0.0
      %2200 = vmatmul.mubr.f32.gmra.mrb[0].mxu0 %v1974
      %v2201 = vpop.f32.mrb[0].mxu0
      %v2202 = vadd.f32 %v1877, %v2201
      %v2203 = vpop.f32.mrb[0].mxu0
      %2204 = vdwg.mxu0
      %2205 = vxpose.xlu0.b32.start [1/16] %v2047, 128
      %2206 = vxpose.xlu0.b32.cont [2/16] %v2052, 128
      %2207 = vxpose.xlu0.b32.cont [3/16] %v2057, 128
      %2208 = vxpose.xlu0.b32.cont [4/16] %v2062, 128
      %2209 = vxpose.xlu0.b32.cont [5/16] %v2067, 128
      %2210 = vxpose.xlu0.b32.cont [6/16] %v2072, 128
      %2211 = vxpose.xlu0.b32.cont [7/16] %v2077, 128
      %2212 = vxpose.xlu0.b32.cont [8/16] %v2082, 128
      %2213 = vxpose.xlu0.b32.cont [9/16] %v2087, 128
      %2214 = vxpose.xlu0.b32.cont [10/16] %v2092, 128
      %2215 = vxpose.xlu0.b32.cont [11/16] %v2097, 128
      %2216 = vxpose.xlu0.b32.cont [12/16] %v2102, 128
      %2217 = vxpose.xlu0.b32.cont [13/16] %v2107, 128
      %2218 = vxpose.xlu0.b32.cont [14/16] %v2112, 128
      %2219 = vxpose.xlu0.b32.cont [15/16] %v2117, 128
      %2220 = vxpose.xlu0.b32.end [16/16] %v2122, 128
      %v2221 = vpop.trf.xlu0
      %v2222 = vpop.trf.xlu0
      %v2223 = vpop.trf.xlu0
      %v2224 = vpop.trf.xlu0
      %v2225 = vpop.trf.xlu0
      %v2226 = vpop.trf.xlu0
      %v2227 = vpop.trf.xlu0
      %v2228 = vpop.trf.xlu0
      %v2229 = vpop.trf.xlu0
      %v2230 = vpop.trf.xlu0
      %v2231 = vpop.trf.xlu0
      %v2232 = vpop.trf.xlu0
      %v2233 = vpop.trf.xlu0
      %v2234 = vpop.trf.xlu0
      %v2235 = vpop.trf.xlu0
      %v2236 = vpop.trf.xlu0
      %2237 = vxpose.xlu0.b32.start [1/16] %v2127, 128
      %2238 = vxpose.xlu0.b32.cont [2/16] %v2132, 128
      %2239 = vxpose.xlu0.b32.cont [3/16] %v2137, 128
      %2240 = vxpose.xlu0.b32.cont [4/16] %v2142, 128
      %2241 = vxpose.xlu0.b32.cont [5/16] %v2147, 128
      %2242 = vxpose.xlu0.b32.cont [6/16] %v2152, 128
      %2243 = vxpose.xlu0.b32.cont [7/16] %v2157, 128
      %2244 = vxpose.xlu0.b32.cont [8/16] %v2162, 128
      %2245 = vxpose.xlu0.b32.cont [9/16] %v2167, 128
      %2246 = vxpose.xlu0.b32.cont [10/16] %v2172, 128
      %2247 = vxpose.xlu0.b32.cont [11/16] %v2177, 128
      %2248 = vxpose.xlu0.b32.cont [12/16] %v2182, 128
      %2249 = vxpose.xlu0.b32.cont [13/16] %v2187, 128
      %2250 = vxpose.xlu0.b32.cont [14/16] %v2192, 128
      %2251 = vxpose.xlu0.b32.cont [15/16] %v2197, 128
      %2252 = vxpose.xlu0.b32.end [16/16] %v2202, 128
      %v2253 = vpop.trf.xlu0
      %v2254 = vpop.trf.xlu0
      %v2255 = vpop.trf.xlu0
      %v2256 = vpop.trf.xlu0
      %v2257 = vpop.trf.xlu0
      %v2258 = vpop.trf.xlu0
      %v2259 = vpop.trf.xlu0
      %v2260 = vpop.trf.xlu0
      %v2261 = vpop.trf.xlu0
      %v2262 = vpop.trf.xlu0
      %v2263 = vpop.trf.xlu0
      %v2264 = vpop.trf.xlu0
      %v2265 = vpop.trf.xlu0
      %v2266 = vpop.trf.xlu0
      %v2267 = vpop.trf.xlu0
      %v2268 = vpop.trf.xlu0
      %2269 = vst [vmem:[%s170] sm:$0xff] %v2221
      %2270 = vst [vmem:[%s170 + $0x8] sm:$0xff] %v2253
      %p2271 = scmp.lt.s32.totalorder %s14, 1
      %s2272 = scalar_select %p2271, %s14, 1
      %s2273 = smul.addr %s2272, 2
      %s2274 = smul.addr %s2273, 8
      %s2275 = scalar_lea.vmem %s3, %s2274
      // Predicated region
      $region33: #{funnel_forward.1} parent=31 // pred_check
        %p2276 = pneg %p100
      $region34: #{funnel_forward.1} parent=31 // pred_check_branch
        %2278 = sbr.rel (%p2276) target = $region36
      $region35: #{funnel_forward.1} parent=31 // pred_region
        _
      $region36: #{funnel_forward.1} parent=31 // pred_fallthru
        _
    $region32: #{funnel_forward.1} parent=5 // pred_fallthru
      _
    %p2279 = scmp.le.s32.totalorder 2, %s9
    // Predicated region
    $region37: #{funnel_forward.1} parent=5 // pred_check
      %p2280 = pneg %p2279
    $region38: #{funnel_forward.1} parent=5 // pred_check_branch
      %2282 = sbr.rel (%p2280) target = $region40
    $region39: #{funnel_forward.1} parent=5 // pred_region
      %s2283 = ssub.s32 %s9, 2
      // Predicated region
      $region41: #{funnel_forward.1} parent=39 // pred_check
        %p2284 = pneg %p106
      $region42: #{funnel_forward.1} parent=39 // pred_check_branch
        %2286 = sbr.rel (%p2284) target = $region44
      $region43: #{funnel_forward.1} parent=39 // pred_region
        %p2287 = scmp.lt.s32.totalorder %s15, 1
        %s2288 = scalar_select %p2287, %s15, 1
        %s2289 = smul.addr %s2288, 2
        %s2290 = smul.addr %s2289, 8
        %s2291 = scalar_lea.vmem %s3, %s2290
      $region44: #{funnel_forward.1} parent=39 // pred_fallthru
        _
    $region40: #{funnel_forward.1} parent=5 // pred_fallthru
      _
  $region6: #{funnel_forward.1} parent=0 // loop_footer
    %s13 = sadd.s32 1, %s9
  $region7: #{funnel_forward.1} parent=0 // loop_footer_branch
    %8 = sbr.rel target = $region3
  $region8: #{funnel_forward.1} parent=0 // loop_exit
    _

</llo_original>
